<compile_context>
chip_gen: v5e
topology: v5e:2x2
jax: 0.10.0
libtpu: 0.0.40
codegen_flags: <defaults>
</compile_context>

<pallas_src>
import functools

import jax
import jax.numpy as jnp
import numpy as np
from jax import lax
from jax.experimental import pallas as pl
from jax.experimental.pallas import tpu as pltpu


def _round_up(a, b):
    return (a + b - 1) // b * b


def _quantizer_kernel(x_ref, en_ref, e2_ref, cb_ref, q_ref, idx_ref, sq_ref, *,
                      m_valid):
    # x_ref:  (TM, D)      tile of input rows
    # en_ref: (K, D)       L2-normalized codebook (precomputed in wrapper)
    # e2_ref: (1, K)       squared norms of e_n rows (precomputed in wrapper)
    # cb_ref: (K, D)       raw codebook (used for the actual lookup)
    # q_ref:  (TM, D)      quantized rows (raw codebook entries)      -> output
    # idx_ref:(1, 1, TM)   argmin indices, lane-dense                 -> output
    # sq_ref: (1, 1, 128)  per-tile partial sum((quant - x_n)^2)      -> output
    tm, _ = x_ref.shape
    k = en_ref.shape[0]

    x = x_ref[...].astype(jnp.float32)           # (TM, D)
    e_n = en_ref[...]                            # (K, D)
    e2 = e2_ref[...]                             # (1, K)
    cb = cb_ref[...]                             # (K, D)

    # F.normalize(x, dim=-1) (eps-clamped like torch)
    eps = 1e-12
    x_n = x / jnp.maximum(jnp.sqrt(jnp.sum(x * x, axis=-1, keepdims=True)), eps)
    x2 = jnp.sum(x_n * x_n, axis=-1, keepdims=True)                    # (TM, 1)

    # squared Euclidean distances: ||x||^2 + ||e||^2 - 2 x.e (argmin == cdist argmin)
    dot = jnp.dot(x_n, e_n.T, preferred_element_type=jnp.float32)      # (TM, K)
    d2 = x2 + e2 - 2.0 * dot                                           # (TM, K)

    # argmin over codebook axis (first index on ties, like torch.argmin)
    d_min = jnp.min(d2, axis=-1, keepdims=True)
    k_iota = lax.broadcasted_iota(jnp.int32, d2.shape, 1)
    idx = jnp.min(jnp.where(d2 <= d_min, k_iota, k), axis=-1)          # (TM,)

    # codebook lookup via one-hot matmul (MXU gather) against RAW codebook
    one_hot = (k_iota == idx[:, None]).astype(jnp.float32)             # (TM, K)
    quantized = jnp.dot(one_hot, cb, preferred_element_type=jnp.float32)  # (TM, D)

    # per-tile partial of sum((quantized - x_n)^2), masking zero-padded rows
    row = pl.program_id(0) * tm + lax.broadcasted_iota(jnp.int32, (tm, 1), 0)
    valid = row < m_valid
    diff = quantized - x_n
    sq = jnp.sum(jnp.where(valid, diff * diff, 0.0))                   # scalar

    q_ref[...] = quantized.astype(q_ref.dtype)
    idx_ref[...] = idx.astype(jnp.int32).reshape(1, 1, tm)
    sq_ref[...] = jnp.broadcast_to(sq.astype(jnp.float32), (1, 1, 128))


@functools.partial(jax.jit, static_argnames=("tile_m",))
def quantizer_forward(x, codebook, *, tile_m=1024):
    """Pallas equivalent of Quantizer.forward.

    x:        (B, T, D) float
    codebook: (K, D)    float  (nn.Embedding weight)
    returns (quantized (B,T,D) f32, indices (B,T) int32, quantize_loss scalar)
    """
    B, T, D = x.shape
    K, Dc = codebook.shape
    assert D == Dc
    M = B * T

    # ---- hoisted codebook preprocessing (once, outside the grid loop) ----
    eps = 1e-12
    cb = codebook.astype(jnp.float32)
    e_n = cb / jnp.maximum(jnp.sqrt(jnp.sum(cb * cb, axis=-1, keepdims=True)), eps)
    e2 = jnp.sum(e_n * e_n, axis=-1)[None, :].astype(jnp.float32)      # (1, K)

    # ---- tile selection: big, lane-aligned tiles; pad rows to a multiple ----
    tm = int(min(tile_m, _round_up(M, 128)))   # don't over-pad tiny inputs
    tm = _round_up(tm, 128)                    # lane-dense idx output rows
    m_pad = _round_up(M, tm)
    grid_m = m_pad // tm

    x2d = x.reshape(M, D).astype(jnp.float32)
    if m_pad != M:
        x2d = jnp.pad(x2d, ((0, m_pad - M), (0, 0)))

    kernel = functools.partial(_quantizer_kernel, m_valid=M)

    q2d, idx3d, sq3d = pl.pallas_call(
        kernel,
        out_shape=(
            jax.ShapeDtypeStruct((m_pad, D), jnp.float32),
            jax.ShapeDtypeStruct((grid_m, 1, tm), jnp.int32),
            jax.ShapeDtypeStruct((grid_m, 1, 128), jnp.float32),
        ),
        grid_spec=pltpu.PrefetchScalarGridSpec(
            num_scalar_prefetch=0,
            grid=(grid_m,),
            in_specs=[
                pl.BlockSpec((tm, D), lambda i: (i, 0)),   # x row tile
                pl.BlockSpec((K, D), lambda i: (0, 0)),    # normalized codebook
                pl.BlockSpec((1, K), lambda i: (0, 0)),    # ||e_n||^2 row
                pl.BlockSpec((K, D), lambda i: (0, 0)),    # raw codebook
            ],
            out_specs=[
                pl.BlockSpec((tm, D), lambda i: (i, 0)),
                pl.BlockSpec((1, 1, tm), lambda i: (i, 0, 0)),
                pl.BlockSpec((1, 1, 128), lambda i: (i, 0, 0)),
            ],
        ),
        compiler_params=pltpu.CompilerParams(
            dimension_semantics=("parallel",),      # megacore sharding on v7x
            vmem_limit_bytes=32 * 1024 * 1024,      # raise if sweeping tile_m >= 4096
        ),
    )(x2d, e_n, e2, cb)

    quantized = q2d[:M].reshape(B, T, D)
    indices = idx3d.reshape(m_pad)[:M].reshape(B, T)

    # codebook_loss + 0.25*commitment_loss; forward value = 1.25*mean((q - x_n)^2)
    quantize_loss = 1.25 * jnp.sum(sq3d[:, 0, 0]) / (M * D)

    # straight-through: forward value of x_n + (quantized - x_n).detach() == quantized
    # TODO(synk): backward pass (straight-through / detach gradients) would need jax.custom_vjp.
    return quantized, indices, quantize_loss


def _reference(x, codebook):
    # pure-JAX reference for sanity checking
    eps = 1e-12
    x_n = x / jnp.maximum(jnp.linalg.norm(x, axis=-1, keepdims=True), eps)
    e_n = codebook / jnp.maximum(jnp.linalg.norm(codebook, axis=-1, keepdims=True), eps)
    d2 = (jnp.sum(x_n * x_n, -1, keepdims=True)
          + jnp.sum(e_n * e_n, -1)[None, None, :]
          - 2.0 * jnp.einsum("btd,kd->btk", x_n, e_n,
                             precision=lax.Precision.HIGHEST))
    idx = jnp.argmin(d2, axis=-1)
    q = codebook[idx]
    loss = 1.25 * jnp.mean((q - x_n) ** 2)
    return q, idx, loss


def _check(x, codebook, **kwargs):
    quantized, indices, loss = quantizer_forward(x, codebook, **kwargs)
    jax.block_until_ready((quantized, indices, loss))
    q_ref, idx_ref, loss_ref = _reference(x, codebook)
    assert np.array_equal(np.asarray(indices), np.asarray(idx_ref))
    assert np.allclose(np.asarray(quantized), np.asarray(q_ref), atol=1e-5)
    assert np.allclose(float(loss), float(loss_ref), atol=1e-6)


if __name__ == "__main__":
    # small TiTokConfig-like sizes: codebook_size=256, latent_dim=32
    key = jax.random.PRNGKey(0)
    kx, kc, kx2 = jax.random.split(key, 3)

    B, T, D, K = 2, 8, 32, 256
    x = jax.random.normal(kx, (B, T, D), dtype=jnp.float32)
    # nn.Embedding(K, D).weight.data.uniform_(-1/K, 1/K)
    codebook = jax.random.uniform(kc, (K, D), dtype=jnp.float32,
                                  minval=-1.0 / K, maxval=1.0 / K)
    _check(x, codebook)                         # single tile + row padding

    # second case exercising multiple grid tiles + padding mask
    x_b = jax.random.normal(kx2, (3, 50, D), dtype=jnp.float32)
    _check(x_b, codebook, tile_m=128)           # M=150 -> 2 tiles of 128, 106 padded rows

    print("KERNEL_OK")
</pallas_src>

<mosaic_0001>
module attributes {stable_mosaic.version = 11 : i64} {
  func.func @_quantizer_kernel(%arg0: i32, %arg1: memref<128x32xf32, #tpu.memory_space<vmem>>, %arg2: memref<256x32xf32, #tpu.memory_space<vmem>>, %arg3: memref<1x256xf32, #tpu.memory_space<vmem>>, %arg4: memref<256x32xf32, #tpu.memory_space<vmem>>, %arg5: memref<128x32xf32, #tpu.memory_space<vmem>>, %arg6: memref<1x1x128xi32, #tpu.memory_space<vmem>>, %arg7: memref<1x1x128xf32, #tpu.memory_space<vmem>>) attributes {dimension_semantics = [#tpu.dimension_semantics<parallel>], iteration_bounds = array<i64: 1>, scalar_prefetch = 0 : i64, scratch_operands = 0 : i64, tpu.core_type = #tpu.core_type<tc>, window_params = [{transform_indices = @transform_0, window_bounds = array<i64: 128, 32>}, {pipeline_mode = #tpu.pipeline_mode<synchronous>, transform_indices = @transform_1, window_bounds = array<i64: 256, 32>}, {pipeline_mode = #tpu.pipeline_mode<synchronous>, transform_indices = @transform_2, window_bounds = array<i64: 1, 256>}, {pipeline_mode = #tpu.pipeline_mode<synchronous>, transform_indices = @transform_3, window_bounds = array<i64: 256, 32>}, {transform_indices = @transform_4, window_bounds = array<i64: 128, 32>}, {transform_indices = @transform_5, window_bounds = array<i64: 1, 1, 128>}, {transform_indices = @transform_6, window_bounds = array<i64: 1, 1, 128>}]} {
    %c0 = arith.constant 0 : index
    %c0_0 = arith.constant 0 : index
    %0 = vector.load %arg1[%c0, %c0_0] : memref<128x32xf32, #tpu.memory_space<vmem>>, vector<128x32xf32>
    %c0_1 = arith.constant 0 : index
    %c0_2 = arith.constant 0 : index
    %1 = vector.load %arg2[%c0_1, %c0_2] : memref<256x32xf32, #tpu.memory_space<vmem>>, vector<256x32xf32>
    %c0_3 = arith.constant 0 : index
    %c0_4 = arith.constant 0 : index
    %2 = vector.load %arg3[%c0_3, %c0_4] : memref<1x256xf32, #tpu.memory_space<vmem>>, vector<1x256xf32>
    %c0_5 = arith.constant 0 : index
    %c0_6 = arith.constant 0 : index
    %3 = vector.load %arg4[%c0_5, %c0_6] : memref<256x32xf32, #tpu.memory_space<vmem>>, vector<256x32xf32>
    %4 = arith.mulf %0, %0 : vector<128x32xf32>
    %cst = arith.constant dense<0.000000e+00> : vector<128xf32>
    %5 = vector.multi_reduction <add>, %4, %cst [1] : vector<128x32xf32> to vector<128xf32>
    %6 = vector.shape_cast %5 : vector<128xf32> to vector<128x1xf32>
    %7 = math.sqrt %6 : vector<128x1xf32>
    %cst_7 = arith.constant 9.99999996E-13 : f32
    %8 = vector.broadcast %cst_7 : f32 to vector<128x1xf32>
    %9 = arith.maximumf %7, %8 : vector<128x1xf32>
    %10 = vector.broadcast %9 : vector<128x1xf32> to vector<128x32xf32>
    %11 = arith.divf %0, %10 : vector<128x32xf32>
    %12 = arith.mulf %11, %11 : vector<128x32xf32>
    %cst_8 = arith.constant dense<0.000000e+00> : vector<128xf32>
    %13 = vector.multi_reduction <add>, %12, %cst_8 [1] : vector<128x32xf32> to vector<128xf32>
    %14 = vector.shape_cast %13 : vector<128xf32> to vector<128x1xf32>
    %15 = tpu.transpose %1, [1, 0] : vector<256x32xf32> -> vector<32x256xf32>
    %cst_9 = arith.constant dense<0.000000e+00> : vector<128x256xf32>
    %16 = tpu.matmul %11, %15, %cst_9 {dimension_numbers = #tpu.dot_dimension_numbers<[1], [0], [0], [1], [0, 0, 1, 1], [], []>} : vector<128x32xf32>, vector<32x256xf32>, vector<128x256xf32> -> vector<128x256xf32>
    %17 = vector.broadcast %14 : vector<128x1xf32> to vector<128x256xf32>
    %18 = vector.broadcast %2 : vector<1x256xf32> to vector<128x256xf32>
    %19 = arith.addf %17, %18 : vector<128x256xf32>
    %cst_10 = arith.constant 2.000000e+00 : f32
    %20 = vector.broadcast %cst_10 : f32 to vector<128x256xf32>
    %21 = arith.mulf %20, %16 : vector<128x256xf32>
    %22 = arith.subf %19, %21 : vector<128x256xf32>
    %cst_11 = arith.constant dense<0x7F800000> : vector<128xf32>
    %23 = vector.multi_reduction <minimumf>, %22, %cst_11 [1] : vector<128x256xf32> to vector<128xf32>
    %24 = vector.shape_cast %23 : vector<128xf32> to vector<128x1xf32>
    %25 = tpu.iota {dimensions = array<i32: 1>} : vector<128x256xi32>
    %26 = vector.broadcast %24 : vector<128x1xf32> to vector<128x256xf32>
    %27 = arith.cmpf ole, %22, %26 : vector<128x256xf32>
    %c256_i32 = arith.constant 256 : i32
    %28 = vector.broadcast %c256_i32 : i32 to vector<128x256xi32>
    %29 = arith.select %27, %25, %28 : vector<128x256xi1>, vector<128x256xi32>
    %cst_12 = arith.constant dense<2147483647> : vector<128xi32>
    %30 = vector.multi_reduction <minsi>, %29, %cst_12 [1] : vector<128x256xi32> to vector<128xi32>
    %31 = vector.shape_cast %30 : vector<128xi32> to vector<128x1xi32>
    %32 = vector.broadcast %31 : vector<128x1xi32> to vector<128x256xi32>
    %33 = arith.cmpi eq, %25, %32 : vector<128x256xi32>
    %34 = arith.extui %33 : vector<128x256xi1> to vector<128x256xi32>
    %35 = arith.sitofp %34 : vector<128x256xi32> to vector<128x256xf32>
    %cst_13 = arith.constant dense<0.000000e+00> : vector<128x32xf32>
    %36 = tpu.matmul %35, %3, %cst_13 {dimension_numbers = #tpu.dot_dimension_numbers<[1], [0], [0], [1], [0, 0, 1, 1], [], []>} : vector<128x256xf32>, vector<256x32xf32>, vector<128x32xf32> -> vector<128x32xf32>
    %c128_i32 = arith.constant 128 : i32
    %37 = arith.muli %arg0, %c128_i32 : i32
    %38 = tpu.iota {dimensions = array<i32: 0>} : vector<128x1xi32>
    %39 = vector.broadcast %37 : i32 to vector<128x1xi32>
    %40 = arith.addi %39, %38 : vector<128x1xi32>
    %c16_i32 = arith.constant 16 : i32
    %41 = vector.broadcast %c16_i32 : i32 to vector<128x1xi32>
    %42 = arith.cmpi slt, %40, %41 : vector<128x1xi32>
    %43 = arith.subf %36, %11 : vector<128x32xf32>
    %44 = arith.mulf %43, %43 : vector<128x32xf32>
    %cst_14 = arith.constant 0.000000e+00 : f32
    %45 = vector.shape_cast %42 : vector<128x1xi1> to vector<128x1xi1>
    %46 = vector.broadcast %45 : vector<128x1xi1> to vector<128x32xi1>
    %47 = vector.broadcast %cst_14 : f32 to vector<128x32xf32>
    %48 = arith.select %46, %44, %47 : vector<128x32xi1>, vector<128x32xf32>
    %49 = vector.shape_cast %48 : vector<128x32xf32> to vector<1x128x32xf32>
    %cst_15 = arith.constant dense<0.000000e+00> : vector<1xf32>
    %50 = vector.multi_reduction <add>, %49, %cst_15 [1, 2] : vector<1x128x32xf32> to vector<1xf32>
    %51 = vector.shape_cast %50 : vector<1xf32> to vector<1x1x1xf32>
    %52 = vector.extract %51[0, 0, 0] : f32 from vector<1x1x1xf32>
    %c0_16 = arith.constant 0 : index
    %c0_17 = arith.constant 0 : index
    %53 = vector.load %arg5[%c0_16, %c0_17] : memref<128x32xf32, #tpu.memory_space<vmem>>, vector<128x32xf32>
    tpu.vector_store %arg5[%c0_16, %c0_17], %36 {strides = array<i32>} : memref<128x32xf32, #tpu.memory_space<vmem>>, vector<128x32xf32>,
    %54 = vector.shape_cast %30 : vector<128xi32> to vector<1x1x128xi32>
    %c0_18 = arith.constant 0 : index
    %c0_19 = arith.constant 0 : index
    %c0_20 = arith.constant 0 : index
    %55 = vector.load %arg6[%c0_18, %c0_19, %c0_20] : memref<1x1x128xi32, #tpu.memory_space<vmem>>, vector<1x1x128xi32>
    tpu.vector_store %arg6[%c0_18, %c0_19, %c0_20], %54 {strides = array<i32>} : memref<1x1x128xi32, #tpu.memory_space<vmem>>, vector<1x1x128xi32>,
    %56 = vector.broadcast %52 : f32 to vector<1x1x128xf32>
    %c0_21 = arith.constant 0 : index
    %c0_22 = arith.constant 0 : index
    %c0_23 = arith.constant 0 : index
    %57 = vector.load %arg7[%c0_21, %c0_22, %c0_23] : memref<1x1x128xf32, #tpu.memory_space<vmem>>, vector<1x1x128xf32>
    tpu.vector_store %arg7[%c0_21, %c0_22, %c0_23], %56 {strides = array<i32>} : memref<1x1x128xf32, #tpu.memory_space<vmem>>, vector<1x1x128xf32>,
    return
  }
  func.func @transform_0(%arg0: i32) -> (i32, i32) {
    %c0_i32 = arith.constant 0 : i32
    %c0_i32_0 = arith.constant 0 : i32
    return %arg0, %c0_i32 : i32, i32
  }
  func.func @transform_1(%arg0: i32) -> (i32, i32) {
    %c0_i32 = arith.constant 0 : i32
    %c0_i32_0 = arith.constant 0 : i32
    %c0_i32_1 = arith.constant 0 : i32
    return %c0_i32, %c0_i32_0 : i32, i32
  }
  func.func @transform_2(%arg0: i32) -> (i32, i32) {
    %c0_i32 = arith.constant 0 : i32
    %c0_i32_0 = arith.constant 0 : i32
    %c0_i32_1 = arith.constant 0 : i32
    return %c0_i32, %c0_i32_0 : i32, i32
  }
  func.func @transform_3(%arg0: i32) -> (i32, i32) {
    %c0_i32 = arith.constant 0 : i32
    %c0_i32_0 = arith.constant 0 : i32
    %c0_i32_1 = arith.constant 0 : i32
    return %c0_i32, %c0_i32_0 : i32, i32
  }
  func.func @transform_4(%arg0: i32) -> (i32, i32) {
    %c0_i32 = arith.constant 0 : i32
    %c0_i32_0 = arith.constant 0 : i32
    return %arg0, %c0_i32 : i32, i32
  }
  func.func @transform_5(%arg0: i32) -> (i32, i32, i32) {
    %c0_i32 = arith.constant 0 : i32
    %c0_i32_0 = arith.constant 0 : i32
    %c0_i32_1 = arith.constant 0 : i32
    return %arg0, %c0_i32, %c0_i32_0 : i32, i32, i32
  }
  func.func @transform_6(%arg0: i32) -> (i32, i32, i32) {
    %c0_i32 = arith.constant 0 : i32
    %c0_i32_0 = arith.constant 0 : i32
    %c0_i32_1 = arith.constant 0 : i32
    return %arg0, %c0_i32, %c0_i32_0 : i32, i32, i32
  }
}

</mosaic_0001>

<llo_original>
// kernel: quantizer_forward.1
$region0: #{quantizer_forward.1}
  #allocation0 [shape = 'u32[]', space=smem, size = 0x4, offset = 0x4, fixed_abs, tag = 'smem constant byte address 0x4 - core index']
  #allocation1 [shape = 'u32[72,128]{1,0:T(1,128)}', space=vmem, size = 0x9000, scoped, tag = 'internal scratch']
  %s0 = inlined_call_operand.vmem [shape: f32[128,32], index: 0, kind: input, shape index: {}]
  %s1 = inlined_call_operand.vmem [shape: f32[256,32], index: 1, kind: input, shape index: {}]
  %s2 = inlined_call_operand.vmem [shape: f32[1,256], index: 2, kind: input, shape index: {}]
  %s3 = inlined_call_operand.vmem [shape: f32[256,32], index: 3, kind: input, shape index: {}]
  %s4 = inlined_call_operand.vmem [shape: f32[128,32], index: 4, kind: output, shape index: {0}]
  %s5 = inlined_call_operand.vmem [shape: s32[1,1,128], index: 5, kind: output, shape index: {1}]
  %s6 = inlined_call_operand.vmem [shape: f32[1,1,128], index: 6, kind: output, shape index: {2}]
  %7 = xla_tuple %s4, %s5, %s6
  %s8 = sld [smem:[#allocation0]]
  $region42: #{quantizer_forward.1} parent=0
    _
  %s10 = ssub.s32 1, %s8
  %s11 = scalar_select 0, %s10, %s8
  // Predicated region
  $region2: #{quantizer_forward.1} parent=0 // pred_check
    _
  $region3: #{quantizer_forward.1} parent=0 // pred_check_branch
    %13 = sbr.rel (0) target = $region5
  $region4: #{quantizer_forward.1} parent=0 // pred_region
    _
  $region5: #{quantizer_forward.1} parent=0 // pred_fallthru
    _
  // Predicated region
  $region6: #{quantizer_forward.1} parent=0 // pred_check
    _
  $region7: #{quantizer_forward.1} parent=0 // pred_check_branch
    %15 = sbr.rel (0) target = $region9
  $region8: #{quantizer_forward.1} parent=0 // pred_region
    _
  $region9: #{quantizer_forward.1} parent=0 // pred_fallthru
    _
  // Predicated region
  $region10: #{quantizer_forward.1} parent=0 // pred_check
    _
  $region11: #{quantizer_forward.1} parent=0 // pred_check_branch
    %17 = sbr.rel (0) target = $region13
  $region12: #{quantizer_forward.1} parent=0 // pred_region
    _
  $region13: #{quantizer_forward.1} parent=0 // pred_fallthru
    _
  // Predicated region
  $region14: #{quantizer_forward.1} parent=0 // pred_check
    _
  $region15: #{quantizer_forward.1} parent=0 // pred_check_branch
    %19 = sbr.rel (0) target = $region17
  $region16: #{quantizer_forward.1} parent=0 // pred_region
    _
  $region17: #{quantizer_forward.1} parent=0 // pred_fallthru
    _
  %v20 = vld [vmem:[%s0] sm:$0xff]
  %v21 = vld [vmem:[%s0 + $0x8] sm:$0xff]
  %v22 = vld [vmem:[%s0 + $0x10] sm:$0xff]
  %v23 = vld [vmem:[%s0 + $0x18] sm:$0xff]
  %v24 = vld [vmem:[%s0 + $0x20] sm:$0xff]
  %v25 = vld [vmem:[%s0 + $0x28] sm:$0xff]
  %v26 = vld [vmem:[%s0 + $0x30] sm:$0xff]
  %v27 = vld [vmem:[%s0 + $0x38] sm:$0xff]
  %v28 = vld [vmem:[%s0 + $0x40] sm:$0xff]
  %v29 = vld [vmem:[%s0 + $0x48] sm:$0xff]
  %v30 = vld [vmem:[%s0 + $0x50] sm:$0xff]
  %v31 = vld [vmem:[%s0 + $0x58] sm:$0xff]
  %v32 = vld [vmem:[%s0 + $0x60] sm:$0xff]
  %v33 = vld [vmem:[%s0 + $0x68] sm:$0xff]
  %v34 = vld [vmem:[%s0 + $0x70] sm:$0xff]
  %v35 = vld [vmem:[%s0 + $0x78] sm:$0xff]
  %v36 = vld [vmem:[%s1] sm:$0xff]
  %v37 = vld [vmem:[%s1 + $0x8] sm:$0xff]
  %v38 = vld [vmem:[%s1 + $0x10] sm:$0xff]
  %v39 = vld [vmem:[%s1 + $0x18] sm:$0xff]
  %v40 = vld [vmem:[%s1 + $0x20] sm:$0xff]
  %v41 = vld [vmem:[%s1 + $0x28] sm:$0xff]
  %v42 = vld [vmem:[%s1 + $0x30] sm:$0xff]
  %v43 = vld [vmem:[%s1 + $0x38] sm:$0xff]
  %v44 = vld [vmem:[%s1 + $0x40] sm:$0xff]
  %v45 = vld [vmem:[%s1 + $0x48] sm:$0xff]
  %v46 = vld [vmem:[%s1 + $0x50] sm:$0xff]
  %v47 = vld [vmem:[%s1 + $0x58] sm:$0xff]
  %v48 = vld [vmem:[%s1 + $0x60] sm:$0xff]
  %v49 = vld [vmem:[%s1 + $0x68] sm:$0xff]
  %v50 = vld [vmem:[%s1 + $0x70] sm:$0xff]
  %v51 = vld [vmem:[%s1 + $0x78] sm:$0xff]
  %v52 = vld [vmem:[%s1 + $0x80] sm:$0xff]
  %v53 = vld [vmem:[%s1 + $0x88] sm:$0xff]
  %v54 = vld [vmem:[%s1 + $0x90] sm:$0xff]
  %v55 = vld [vmem:[%s1 + $0x98] sm:$0xff]
  %v56 = vld [vmem:[%s1 + $0xa0] sm:$0xff]
  %v57 = vld [vmem:[%s1 + $0xa8] sm:$0xff]
  %v58 = vld [vmem:[%s1 + $0xb0] sm:$0xff]
  %v59 = vld [vmem:[%s1 + $0xb8] sm:$0xff]
  %v60 = vld [vmem:[%s1 + $0xc0] sm:$0xff]
  %v61 = vld [vmem:[%s1 + $0xc8] sm:$0xff]
  %v62 = vld [vmem:[%s1 + $0xd0] sm:$0xff]
  %v63 = vld [vmem:[%s1 + $0xd8] sm:$0xff]
  %v64 = vld [vmem:[%s1 + $0xe0] sm:$0xff]
  %v65 = vld [vmem:[%s1 + $0xe8] sm:$0xff]
  %v66 = vld [vmem:[%s1 + $0xf0] sm:$0xff]
  %v67 = vld [vmem:[%s1 + $0xf8] sm:$0xff]
  %v68 = vld [vmem:[%s2] sm:$0x3]
  %v69 = vld [vmem:[%s3] sm:$0xff]
  %v70 = vld [vmem:[%s3 + $0x8] sm:$0xff]
  %v71 = vld [vmem:[%s3 + $0x10] sm:$0xff]
  %v72 = vld [vmem:[%s3 + $0x18] sm:$0xff]
  %v73 = vld [vmem:[%s3 + $0x20] sm:$0xff]
  %v74 = vld [vmem:[%s3 + $0x28] sm:$0xff]
  %v75 = vld [vmem:[%s3 + $0x30] sm:$0xff]
  %v76 = vld [vmem:[%s3 + $0x38] sm:$0xff]
  %v77 = vld [vmem:[%s3 + $0x40] sm:$0xff]
  %v78 = vld [vmem:[%s3 + $0x48] sm:$0xff]
  %v79 = vld [vmem:[%s3 + $0x50] sm:$0xff]
  %v80 = vld [vmem:[%s3 + $0x58] sm:$0xff]
  %v81 = vld [vmem:[%s3 + $0x60] sm:$0xff]
  %v82 = vld [vmem:[%s3 + $0x68] sm:$0xff]
  %v83 = vld [vmem:[%s3 + $0x70] sm:$0xff]
  %v84 = vld [vmem:[%s3 + $0x78] sm:$0xff]
  %v85 = vld [vmem:[%s3 + $0x80] sm:$0xff]
  %v86 = vld [vmem:[%s3 + $0x88] sm:$0xff]
  %v87 = vld [vmem:[%s3 + $0x90] sm:$0xff]
  %v88 = vld [vmem:[%s3 + $0x98] sm:$0xff]
  %v89 = vld [vmem:[%s3 + $0xa0] sm:$0xff]
  %v90 = vld [vmem:[%s3 + $0xa8] sm:$0xff]
  %v91 = vld [vmem:[%s3 + $0xb0] sm:$0xff]
  %v92 = vld [vmem:[%s3 + $0xb8] sm:$0xff]
  %v93 = vld [vmem:[%s3 + $0xc0] sm:$0xff]
  %v94 = vld [vmem:[%s3 + $0xc8] sm:$0xff]
  %v95 = vld [vmem:[%s3 + $0xd0] sm:$0xff]
  %v96 = vld [vmem:[%s3 + $0xd8] sm:$0xff]
  %v97 = vld [vmem:[%s3 + $0xe0] sm:$0xff]
  %v98 = vld [vmem:[%s3 + $0xe8] sm:$0xff]
  %v99 = vld [vmem:[%s3 + $0xf0] sm:$0xff]
  %v100 = vld [vmem:[%s3 + $0xf8] sm:$0xff]
  %v101 = vmul.f32 %v20, %v20
  %v102 = vmul.f32 %v21, %v21
  %v103 = vmul.f32 %v22, %v22
  %v104 = vmul.f32 %v23, %v23
  %v105 = vmul.f32 %v24, %v24
  %v106 = vmul.f32 %v25, %v25
  %v107 = vmul.f32 %v26, %v26
  %v108 = vmul.f32 %v27, %v27
  %v109 = vmul.f32 %v28, %v28
  %v110 = vmul.f32 %v29, %v29
  %v111 = vmul.f32 %v30, %v30
  %v112 = vmul.f32 %v31, %v31
  %v113 = vmul.f32 %v32, %v32
  %v114 = vmul.f32 %v33, %v33
  %v115 = vmul.f32 %v34, %v34
  %v116 = vmul.f32 %v35, %v35
  %vm117 = vcmask 261120
  %v118 = vsel %vm117, %v101, 0.0
  %119 = vadd.xlane.f32.xlu0 %v118
  %v120 = vpop.xlane.xlu0 %119
  %v121 = vsel %vm117, %v102, 0.0
  %122 = vadd.xlane.f32.xlu0 %v121
  %v123 = vpop.xlane.xlu0 %122
  %v124 = vsel %vm117, %v103, 0.0
  %125 = vadd.xlane.f32.xlu0 %v124
  %v126 = vpop.xlane.xlu0 %125
  %v127 = vsel %vm117, %v104, 0.0
  %128 = vadd.xlane.f32.xlu0 %v127
  %v129 = vpop.xlane.xlu0 %128
  %v130 = vsel %vm117, %v105, 0.0
  %131 = vadd.xlane.f32.xlu0 %v130
  %v132 = vpop.xlane.xlu0 %131
  %v133 = vsel %vm117, %v106, 0.0
  %134 = vadd.xlane.f32.xlu0 %v133
  %v135 = vpop.xlane.xlu0 %134
  %v136 = vsel %vm117, %v107, 0.0
  %137 = vadd.xlane.f32.xlu0 %v136
  %v138 = vpop.xlane.xlu0 %137
  %v139 = vsel %vm117, %v108, 0.0
  %140 = vadd.xlane.f32.xlu0 %v139
  %v141 = vpop.xlane.xlu0 %140
  %v142 = vsel %vm117, %v109, 0.0
  %143 = vadd.xlane.f32.xlu0 %v142
  %v144 = vpop.xlane.xlu0 %143
  %v145 = vsel %vm117, %v110, 0.0
  %146 = vadd.xlane.f32.xlu0 %v145
  %v147 = vpop.xlane.xlu0 %146
  %v148 = vsel %vm117, %v111, 0.0
  %149 = vadd.xlane.f32.xlu0 %v148
  %v150 = vpop.xlane.xlu0 %149
  %v151 = vsel %vm117, %v112, 0.0
  %152 = vadd.xlane.f32.xlu0 %v151
  %v153 = vpop.xlane.xlu0 %152
  %v154 = vsel %vm117, %v113, 0.0
  %155 = vadd.xlane.f32.xlu0 %v154
  %v156 = vpop.xlane.xlu0 %155
  %v157 = vsel %vm117, %v114, 0.0
  %158 = vadd.xlane.f32.xlu0 %v157
  %v159 = vpop.xlane.xlu0 %158
  %v160 = vsel %vm117, %v115, 0.0
  %161 = vadd.xlane.f32.xlu0 %v160
  %v162 = vpop.xlane.xlu0 %161
  %v163 = vsel %vm117, %v116, 0.0
  %164 = vadd.xlane.f32.xlu0 %v163
  %v165 = vpop.xlane.xlu0 %164
  %v166 = vrsqrt.pop %v120
  %v167 = vmul.f32 %v166, %v120
  %v168 = vmul.f32 %v167, %v166
  %v169 = vmul.f32 0.5, %v168
  %v170 = vsub.f32 1.5, %v169
  %v171 = vmul.f32 %v166, %v170
  %v172 = vmul.f32 %v120, %v171
  %vm173 = vcmp.eq.f32.partialorder %v120, inf
  %v174 = vsel %vm173, %v120, %v172
  %vm175 = vcmp.eq.f32.partialorder %v120, 0.0
  %v176 = vand.u32 %v120, 2147483648
  %v177 = vsel %vm175, %v176, %v174
  %v178 = vrsqrt.pop %v123
  %v179 = vmul.f32 %v178, %v123
  %v180 = vmul.f32 %v179, %v178
  %v181 = vmul.f32 0.5, %v180
  %v182 = vsub.f32 1.5, %v181
  %v183 = vmul.f32 %v178, %v182
  %v184 = vmul.f32 %v123, %v183
  %vm185 = vcmp.eq.f32.partialorder %v123, inf
  %v186 = vsel %vm185, %v123, %v184
  %vm187 = vcmp.eq.f32.partialorder %v123, 0.0
  %v188 = vand.u32 %v123, 2147483648
  %v189 = vsel %vm187, %v188, %v186
  %v190 = vrsqrt.pop %v126
  %v191 = vmul.f32 %v190, %v126
  %v192 = vmul.f32 %v191, %v190
  %v193 = vmul.f32 0.5, %v192
  %v194 = vsub.f32 1.5, %v193
  %v195 = vmul.f32 %v190, %v194
  %v196 = vmul.f32 %v126, %v195
  %vm197 = vcmp.eq.f32.partialorder %v126, inf
  %v198 = vsel %vm197, %v126, %v196
  %vm199 = vcmp.eq.f32.partialorder %v126, 0.0
  %v200 = vand.u32 %v126, 2147483648
  %v201 = vsel %vm199, %v200, %v198
  %v202 = vrsqrt.pop %v129
  %v203 = vmul.f32 %v202, %v129
  %v204 = vmul.f32 %v203, %v202
  %v205 = vmul.f32 0.5, %v204
  %v206 = vsub.f32 1.5, %v205
  %v207 = vmul.f32 %v202, %v206
  %v208 = vmul.f32 %v129, %v207
  %vm209 = vcmp.eq.f32.partialorder %v129, inf
  %v210 = vsel %vm209, %v129, %v208
  %vm211 = vcmp.eq.f32.partialorder %v129, 0.0
  %v212 = vand.u32 %v129, 2147483648
  %v213 = vsel %vm211, %v212, %v210
  %v214 = vrsqrt.pop %v132
  %v215 = vmul.f32 %v214, %v132
  %v216 = vmul.f32 %v215, %v214
  %v217 = vmul.f32 0.5, %v216
  %v218 = vsub.f32 1.5, %v217
  %v219 = vmul.f32 %v214, %v218
  %v220 = vmul.f32 %v132, %v219
  %vm221 = vcmp.eq.f32.partialorder %v132, inf
  %v222 = vsel %vm221, %v132, %v220
  %vm223 = vcmp.eq.f32.partialorder %v132, 0.0
  %v224 = vand.u32 %v132, 2147483648
  %v225 = vsel %vm223, %v224, %v222
  %v226 = vrsqrt.pop %v135
  %v227 = vmul.f32 %v226, %v135
  %v228 = vmul.f32 %v227, %v226
  %v229 = vmul.f32 0.5, %v228
  %v230 = vsub.f32 1.5, %v229
  %v231 = vmul.f32 %v226, %v230
  %v232 = vmul.f32 %v135, %v231
  %vm233 = vcmp.eq.f32.partialorder %v135, inf
  %v234 = vsel %vm233, %v135, %v232
  %vm235 = vcmp.eq.f32.partialorder %v135, 0.0
  %v236 = vand.u32 %v135, 2147483648
  %v237 = vsel %vm235, %v236, %v234
  %v238 = vrsqrt.pop %v138
  %v239 = vmul.f32 %v238, %v138
  %v240 = vmul.f32 %v239, %v238
  %v241 = vmul.f32 0.5, %v240
  %v242 = vsub.f32 1.5, %v241
  %v243 = vmul.f32 %v238, %v242
  %v244 = vmul.f32 %v138, %v243
  %vm245 = vcmp.eq.f32.partialorder %v138, inf
  %v246 = vsel %vm245, %v138, %v244
  %vm247 = vcmp.eq.f32.partialorder %v138, 0.0
  %v248 = vand.u32 %v138, 2147483648
  %v249 = vsel %vm247, %v248, %v246
  %v250 = vrsqrt.pop %v141
  %v251 = vmul.f32 %v250, %v141
  %v252 = vmul.f32 %v251, %v250
  %v253 = vmul.f32 0.5, %v252
  %v254 = vsub.f32 1.5, %v253
  %v255 = vmul.f32 %v250, %v254
  %v256 = vmul.f32 %v141, %v255
  %vm257 = vcmp.eq.f32.partialorder %v141, inf
  %v258 = vsel %vm257, %v141, %v256
  %vm259 = vcmp.eq.f32.partialorder %v141, 0.0
  %v260 = vand.u32 %v141, 2147483648
  %v261 = vsel %vm259, %v260, %v258
  %v262 = vrsqrt.pop %v144
  %v263 = vmul.f32 %v262, %v144
  %v264 = vmul.f32 %v263, %v262
  %v265 = vmul.f32 0.5, %v264
  %v266 = vsub.f32 1.5, %v265
  %v267 = vmul.f32 %v262, %v266
  %v268 = vmul.f32 %v144, %v267
  %vm269 = vcmp.eq.f32.partialorder %v144, inf
  %v270 = vsel %vm269, %v144, %v268
  %vm271 = vcmp.eq.f32.partialorder %v144, 0.0
  %v272 = vand.u32 %v144, 2147483648
  %v273 = vsel %vm271, %v272, %v270
  %v274 = vrsqrt.pop %v147
  %v275 = vmul.f32 %v274, %v147
  %v276 = vmul.f32 %v275, %v274
  %v277 = vmul.f32 0.5, %v276
  %v278 = vsub.f32 1.5, %v277
  %v279 = vmul.f32 %v274, %v278
  %v280 = vmul.f32 %v147, %v279
  %vm281 = vcmp.eq.f32.partialorder %v147, inf
  %v282 = vsel %vm281, %v147, %v280
  %vm283 = vcmp.eq.f32.partialorder %v147, 0.0
  %v284 = vand.u32 %v147, 2147483648
  %v285 = vsel %vm283, %v284, %v282
  %v286 = vrsqrt.pop %v150
  %v287 = vmul.f32 %v286, %v150
  %v288 = vmul.f32 %v287, %v286
  %v289 = vmul.f32 0.5, %v288
  %v290 = vsub.f32 1.5, %v289
  %v291 = vmul.f32 %v286, %v290
  %v292 = vmul.f32 %v150, %v291
  %vm293 = vcmp.eq.f32.partialorder %v150, inf
  %v294 = vsel %vm293, %v150, %v292
  %vm295 = vcmp.eq.f32.partialorder %v150, 0.0
  %v296 = vand.u32 %v150, 2147483648
  %v297 = vsel %vm295, %v296, %v294
  %v298 = vrsqrt.pop %v153
  %v299 = vmul.f32 %v298, %v153
  %v300 = vmul.f32 %v299, %v298
  %v301 = vmul.f32 0.5, %v300
  %v302 = vsub.f32 1.5, %v301
  %v303 = vmul.f32 %v298, %v302
  %v304 = vmul.f32 %v153, %v303
  %vm305 = vcmp.eq.f32.partialorder %v153, inf
  %v306 = vsel %vm305, %v153, %v304
  %vm307 = vcmp.eq.f32.partialorder %v153, 0.0
  %v308 = vand.u32 %v153, 2147483648
  %v309 = vsel %vm307, %v308, %v306
  %v310 = vrsqrt.pop %v156
  %v311 = vmul.f32 %v310, %v156
  %v312 = vmul.f32 %v311, %v310
  %v313 = vmul.f32 0.5, %v312
  %v314 = vsub.f32 1.5, %v313
  %v315 = vmul.f32 %v310, %v314
  %v316 = vmul.f32 %v156, %v315
  %vm317 = vcmp.eq.f32.partialorder %v156, inf
  %v318 = vsel %vm317, %v156, %v316
  %vm319 = vcmp.eq.f32.partialorder %v156, 0.0
  %v320 = vand.u32 %v156, 2147483648
  %v321 = vsel %vm319, %v320, %v318
  %v322 = vrsqrt.pop %v159
  %v323 = vmul.f32 %v322, %v159
  %v324 = vmul.f32 %v323, %v322
  %v325 = vmul.f32 0.5, %v324
  %v326 = vsub.f32 1.5, %v325
  %v327 = vmul.f32 %v322, %v326
  %v328 = vmul.f32 %v159, %v327
  %vm329 = vcmp.eq.f32.partialorder %v159, inf
  %v330 = vsel %vm329, %v159, %v328
  %vm331 = vcmp.eq.f32.partialorder %v159, 0.0
  %v332 = vand.u32 %v159, 2147483648
  %v333 = vsel %vm331, %v332, %v330
  %v334 = vrsqrt.pop %v162
  %v335 = vmul.f32 %v334, %v162
  %v336 = vmul.f32 %v335, %v334
  %v337 = vmul.f32 0.5, %v336
  %v338 = vsub.f32 1.5, %v337
  %v339 = vmul.f32 %v334, %v338
  %v340 = vmul.f32 %v162, %v339
  %vm341 = vcmp.eq.f32.partialorder %v162, inf
  %v342 = vsel %vm341, %v162, %v340
  %vm343 = vcmp.eq.f32.partialorder %v162, 0.0
  %v344 = vand.u32 %v162, 2147483648
  %v345 = vsel %vm343, %v344, %v342
  %v346 = vrsqrt.pop %v165
  %v347 = vmul.f32 %v346, %v165
  %v348 = vmul.f32 %v347, %v346
  %v349 = vmul.f32 0.5, %v348
  %v350 = vsub.f32 1.5, %v349
  %v351 = vmul.f32 %v346, %v350
  %v352 = vmul.f32 %v165, %v351
  %vm353 = vcmp.eq.f32.partialorder %v165, inf
  %v354 = vsel %vm353, %v165, %v352
  %vm355 = vcmp.eq.f32.partialorder %v165, 0.0
  %v356 = vand.u32 %v165, 2147483648
  %v357 = vsel %vm355, %v356, %v354
  %v358 = vmax.f32 %v177, 1e-12
  %v359 = vmax.f32 %v189, 1e-12
  %v360 = vmax.f32 %v201, 1e-12
  %v361 = vmax.f32 %v213, 1e-12
  %v362 = vmax.f32 %v225, 1e-12
  %v363 = vmax.f32 %v237, 1e-12
  %v364 = vmax.f32 %v249, 1e-12
  %v365 = vmax.f32 %v261, 1e-12
  %v366 = vmax.f32 %v273, 1e-12
  %v367 = vmax.f32 %v285, 1e-12
  %v368 = vmax.f32 %v297, 1e-12
  %v369 = vmax.f32 %v309, 1e-12
  %v370 = vmax.f32 %v321, 1e-12
  %v371 = vmax.f32 %v333, 1e-12
  %v372 = vmax.f32 %v345, 1e-12
  %v373 = vmax.f32 %v357, 1e-12
  %v374 = vrcp.pop %v358
  %v375 = vmul.f32 %v358, %v374
  %v376 = vsub.f32 1.0, %v375
  %v377 = vmul.f32 %v374, %v376
  %v378 = vadd.f32 %v374, %v377
  %vm379 = vweird.f32 %v358
  %vm380 = vweird.f32 %v374
  %vm381 = vmor %vm379, %vm380
  %v382 = vsel %vm381, %v374, %v378
  %v383 = vand.u32 2147483647, %v358
  %vm384 = vcmp.eq.f32.partialorder %v383, 8.507059e+37
  %v385 = vand.u32 %v358, 2147483648
  %v386 = vor.u32 1.1754944e-38, %v385
  %v387 = vsel %vm384, %v386, %v382
  %v388 = vmul.f32 %v20, %v387
  %v389 = vrcp.pop %v359
  %v390 = vmul.f32 %v359, %v389
  %v391 = vsub.f32 1.0, %v390
  %v392 = vmul.f32 %v389, %v391
  %v393 = vadd.f32 %v389, %v392
  %vm394 = vweird.f32 %v359
  %vm395 = vweird.f32 %v389
  %vm396 = vmor %vm394, %vm395
  %v397 = vsel %vm396, %v389, %v393
  %v398 = vand.u32 2147483647, %v359
  %vm399 = vcmp.eq.f32.partialorder %v398, 8.507059e+37
  %v400 = vand.u32 %v359, 2147483648
  %v401 = vor.u32 1.1754944e-38, %v400
  %v402 = vsel %vm399, %v401, %v397
  %v403 = vmul.f32 %v21, %v402
  %v404 = vrcp.pop %v360
  %v405 = vmul.f32 %v360, %v404
  %v406 = vsub.f32 1.0, %v405
  %v407 = vmul.f32 %v404, %v406
  %v408 = vadd.f32 %v404, %v407
  %vm409 = vweird.f32 %v360
  %vm410 = vweird.f32 %v404
  %vm411 = vmor %vm409, %vm410
  %v412 = vsel %vm411, %v404, %v408
  %v413 = vand.u32 2147483647, %v360
  %vm414 = vcmp.eq.f32.partialorder %v413, 8.507059e+37
  %v415 = vand.u32 %v360, 2147483648
  %v416 = vor.u32 1.1754944e-38, %v415
  %v417 = vsel %vm414, %v416, %v412
  %v418 = vmul.f32 %v22, %v417
  %v419 = vrcp.pop %v361
  %v420 = vmul.f32 %v361, %v419
  %v421 = vsub.f32 1.0, %v420
  %v422 = vmul.f32 %v419, %v421
  %v423 = vadd.f32 %v419, %v422
  %vm424 = vweird.f32 %v361
  %vm425 = vweird.f32 %v419
  %vm426 = vmor %vm424, %vm425
  %v427 = vsel %vm426, %v419, %v423
  %v428 = vand.u32 2147483647, %v361
  %vm429 = vcmp.eq.f32.partialorder %v428, 8.507059e+37
  %v430 = vand.u32 %v361, 2147483648
  %v431 = vor.u32 1.1754944e-38, %v430
  %v432 = vsel %vm429, %v431, %v427
  %v433 = vmul.f32 %v23, %v432
  %v434 = vrcp.pop %v362
  %v435 = vmul.f32 %v362, %v434
  %v436 = vsub.f32 1.0, %v435
  %v437 = vmul.f32 %v434, %v436
  %v438 = vadd.f32 %v434, %v437
  %vm439 = vweird.f32 %v362
  %vm440 = vweird.f32 %v434
  %vm441 = vmor %vm439, %vm440
  %v442 = vsel %vm441, %v434, %v438
  %v443 = vand.u32 2147483647, %v362
  %vm444 = vcmp.eq.f32.partialorder %v443, 8.507059e+37
  %v445 = vand.u32 %v362, 2147483648
  %v446 = vor.u32 1.1754944e-38, %v445
  %v447 = vsel %vm444, %v446, %v442
  %v448 = vmul.f32 %v24, %v447
  %v449 = vrcp.pop %v363
  %v450 = vmul.f32 %v363, %v449
  %v451 = vsub.f32 1.0, %v450
  %v452 = vmul.f32 %v449, %v451
  %v453 = vadd.f32 %v449, %v452
  %vm454 = vweird.f32 %v363
  %vm455 = vweird.f32 %v449
  %vm456 = vmor %vm454, %vm455
  %v457 = vsel %vm456, %v449, %v453
  %v458 = vand.u32 2147483647, %v363
  %vm459 = vcmp.eq.f32.partialorder %v458, 8.507059e+37
  %v460 = vand.u32 %v363, 2147483648
  %v461 = vor.u32 1.1754944e-38, %v460
  %v462 = vsel %vm459, %v461, %v457
  %v463 = vmul.f32 %v25, %v462
  %v464 = vrcp.pop %v364
  %v465 = vmul.f32 %v364, %v464
  %v466 = vsub.f32 1.0, %v465
  %v467 = vmul.f32 %v464, %v466
  %v468 = vadd.f32 %v464, %v467
  %vm469 = vweird.f32 %v364
  %vm470 = vweird.f32 %v464
  %vm471 = vmor %vm469, %vm470
  %v472 = vsel %vm471, %v464, %v468
  %v473 = vand.u32 2147483647, %v364
  %vm474 = vcmp.eq.f32.partialorder %v473, 8.507059e+37
  %v475 = vand.u32 %v364, 2147483648
  %v476 = vor.u32 1.1754944e-38, %v475
  %v477 = vsel %vm474, %v476, %v472
  %v478 = vmul.f32 %v26, %v477
  %v479 = vrcp.pop %v365
  %v480 = vmul.f32 %v365, %v479
  %v481 = vsub.f32 1.0, %v480
  %v482 = vmul.f32 %v479, %v481
  %v483 = vadd.f32 %v479, %v482
  %vm484 = vweird.f32 %v365
  %vm485 = vweird.f32 %v479
  %vm486 = vmor %vm484, %vm485
  %v487 = vsel %vm486, %v479, %v483
  %v488 = vand.u32 2147483647, %v365
  %vm489 = vcmp.eq.f32.partialorder %v488, 8.507059e+37
  %v490 = vand.u32 %v365, 2147483648
  %v491 = vor.u32 1.1754944e-38, %v490
  %v492 = vsel %vm489, %v491, %v487
  %v493 = vmul.f32 %v27, %v492
  %v494 = vrcp.pop %v366
  %v495 = vmul.f32 %v366, %v494
  %v496 = vsub.f32 1.0, %v495
  %v497 = vmul.f32 %v494, %v496
  %v498 = vadd.f32 %v494, %v497
  %vm499 = vweird.f32 %v366
  %vm500 = vweird.f32 %v494
  %vm501 = vmor %vm499, %vm500
  %v502 = vsel %vm501, %v494, %v498
  %v503 = vand.u32 2147483647, %v366
  %vm504 = vcmp.eq.f32.partialorder %v503, 8.507059e+37
  %v505 = vand.u32 %v366, 2147483648
  %v506 = vor.u32 1.1754944e-38, %v505
  %v507 = vsel %vm504, %v506, %v502
  %v508 = vmul.f32 %v28, %v507
  %v509 = vrcp.pop %v367
  %v510 = vmul.f32 %v367, %v509
  %v511 = vsub.f32 1.0, %v510
  %v512 = vmul.f32 %v509, %v511
  %v513 = vadd.f32 %v509, %v512
  %vm514 = vweird.f32 %v367
  %vm515 = vweird.f32 %v509
  %vm516 = vmor %vm514, %vm515
  %v517 = vsel %vm516, %v509, %v513
  %v518 = vand.u32 2147483647, %v367
  %vm519 = vcmp.eq.f32.partialorder %v518, 8.507059e+37
  %v520 = vand.u32 %v367, 2147483648
  %v521 = vor.u32 1.1754944e-38, %v520
  %v522 = vsel %vm519, %v521, %v517
  %v523 = vmul.f32 %v29, %v522
  %v524 = vrcp.pop %v368
  %v525 = vmul.f32 %v368, %v524
  %v526 = vsub.f32 1.0, %v525
  %v527 = vmul.f32 %v524, %v526
  %v528 = vadd.f32 %v524, %v527
  %vm529 = vweird.f32 %v368
  %vm530 = vweird.f32 %v524
  %vm531 = vmor %vm529, %vm530
  %v532 = vsel %vm531, %v524, %v528
  %v533 = vand.u32 2147483647, %v368
  %vm534 = vcmp.eq.f32.partialorder %v533, 8.507059e+37
  %v535 = vand.u32 %v368, 2147483648
  %v536 = vor.u32 1.1754944e-38, %v535
  %v537 = vsel %vm534, %v536, %v532
  %v538 = vmul.f32 %v30, %v537
  %v539 = vrcp.pop %v369
  %v540 = vmul.f32 %v369, %v539
  %v541 = vsub.f32 1.0, %v540
  %v542 = vmul.f32 %v539, %v541
  %v543 = vadd.f32 %v539, %v542
  %vm544 = vweird.f32 %v369
  %vm545 = vweird.f32 %v539
  %vm546 = vmor %vm544, %vm545
  %v547 = vsel %vm546, %v539, %v543
  %v548 = vand.u32 2147483647, %v369
  %vm549 = vcmp.eq.f32.partialorder %v548, 8.507059e+37
  %v550 = vand.u32 %v369, 2147483648
  %v551 = vor.u32 1.1754944e-38, %v550
  %v552 = vsel %vm549, %v551, %v547
  %v553 = vmul.f32 %v31, %v552
  %v554 = vrcp.pop %v370
  %v555 = vmul.f32 %v370, %v554
  %v556 = vsub.f32 1.0, %v555
  %v557 = vmul.f32 %v554, %v556
  %v558 = vadd.f32 %v554, %v557
  %vm559 = vweird.f32 %v370
  %vm560 = vweird.f32 %v554
  %vm561 = vmor %vm559, %vm560
  %v562 = vsel %vm561, %v554, %v558
  %v563 = vand.u32 2147483647, %v370
  %vm564 = vcmp.eq.f32.partialorder %v563, 8.507059e+37
  %v565 = vand.u32 %v370, 2147483648
  %v566 = vor.u32 1.1754944e-38, %v565
  %v567 = vsel %vm564, %v566, %v562
  %v568 = vmul.f32 %v32, %v567
  %v569 = vrcp.pop %v371
  %v570 = vmul.f32 %v371, %v569
  %v571 = vsub.f32 1.0, %v570
  %v572 = vmul.f32 %v569, %v571
  %v573 = vadd.f32 %v569, %v572
  %vm574 = vweird.f32 %v371
  %vm575 = vweird.f32 %v569
  %vm576 = vmor %vm574, %vm575
  %v577 = vsel %vm576, %v569, %v573
  %v578 = vand.u32 2147483647, %v371
  %vm579 = vcmp.eq.f32.partialorder %v578, 8.507059e+37
  %v580 = vand.u32 %v371, 2147483648
  %v581 = vor.u32 1.1754944e-38, %v580
  %v582 = vsel %vm579, %v581, %v577
  %v583 = vmul.f32 %v33, %v582
  %v584 = vrcp.pop %v372
  %v585 = vmul.f32 %v372, %v584
  %v586 = vsub.f32 1.0, %v585
  %v587 = vmul.f32 %v584, %v586
  %v588 = vadd.f32 %v584, %v587
  %vm589 = vweird.f32 %v372
  %vm590 = vweird.f32 %v584
  %vm591 = vmor %vm589, %vm590
  %v592 = vsel %vm591, %v584, %v588
  %v593 = vand.u32 2147483647, %v372
  %vm594 = vcmp.eq.f32.partialorder %v593, 8.507059e+37
  %v595 = vand.u32 %v372, 2147483648
  %v596 = vor.u32 1.1754944e-38, %v595
  %v597 = vsel %vm594, %v596, %v592
  %v598 = vmul.f32 %v34, %v597
  %v599 = vrcp.pop %v373
  %v600 = vmul.f32 %v373, %v599
  %v601 = vsub.f32 1.0, %v600
  %v602 = vmul.f32 %v599, %v601
  %v603 = vadd.f32 %v599, %v602
  %vm604 = vweird.f32 %v373
  %vm605 = vweird.f32 %v599
  %vm606 = vmor %vm604, %vm605
  %v607 = vsel %vm606, %v599, %v603
  %v608 = vand.u32 2147483647, %v373
  %vm609 = vcmp.eq.f32.partialorder %v608, 8.507059e+37
  %v610 = vand.u32 %v373, 2147483648
  %v611 = vor.u32 1.1754944e-38, %v610
  %v612 = vsel %vm609, %v611, %v607
  %v613 = vmul.f32 %v35, %v612
  %v614 = vmul.f32 %v388, %v388
  %v615 = vmul.f32 %v403, %v403
  %v616 = vmul.f32 %v418, %v418
  %v617 = vmul.f32 %v433, %v433
  %v618 = vmul.f32 %v448, %v448
  %v619 = vmul.f32 %v463, %v463
  %v620 = vmul.f32 %v478, %v478
  %v621 = vmul.f32 %v493, %v493
  %v622 = vmul.f32 %v508, %v508
  %v623 = vmul.f32 %v523, %v523
  %v624 = vmul.f32 %v538, %v538
  %v625 = vmul.f32 %v553, %v553
  %v626 = vmul.f32 %v568, %v568
  %v627 = vmul.f32 %v583, %v583
  %v628 = vmul.f32 %v598, %v598
  %v629 = vmul.f32 %v613, %v613
  %v630 = vsel %vm117, %v614, 0.0
  %631 = vadd.xlane.f32.xlu0 %v630
  %v632 = vpop.xlane.xlu0 %631
  %v633 = vsel %vm117, %v615, 0.0
  %634 = vadd.xlane.f32.xlu0 %v633
  %v635 = vpop.xlane.xlu0 %634
  %v636 = vsel %vm117, %v616, 0.0
  %637 = vadd.xlane.f32.xlu0 %v636
  %v638 = vpop.xlane.xlu0 %637
  %v639 = vsel %vm117, %v617, 0.0
  %640 = vadd.xlane.f32.xlu0 %v639
  %v641 = vpop.xlane.xlu0 %640
  %v642 = vsel %vm117, %v618, 0.0
  %643 = vadd.xlane.f32.xlu0 %v642
  %v644 = vpop.xlane.xlu0 %643
  %v645 = vsel %vm117, %v619, 0.0
  %646 = vadd.xlane.f32.xlu0 %v645
  %v647 = vpop.xlane.xlu0 %646
  %v648 = vsel %vm117, %v620, 0.0
  %649 = vadd.xlane.f32.xlu0 %v648
  %v650 = vpop.xlane.xlu0 %649
  %v651 = vsel %vm117, %v621, 0.0
  %652 = vadd.xlane.f32.xlu0 %v651
  %v653 = vpop.xlane.xlu0 %652
  %v654 = vsel %vm117, %v622, 0.0
  %655 = vadd.xlane.f32.xlu0 %v654
  %v656 = vpop.xlane.xlu0 %655
  %v657 = vsel %vm117, %v623, 0.0
  %658 = vadd.xlane.f32.xlu0 %v657
  %v659 = vpop.xlane.xlu0 %658
  %v660 = vsel %vm117, %v624, 0.0
  %661 = vadd.xlane.f32.xlu0 %v660
  %v662 = vpop.xlane.xlu0 %661
  %v663 = vsel %vm117, %v625, 0.0
  %664 = vadd.xlane.f32.xlu0 %v663
  %v665 = vpop.xlane.xlu0 %664
  %v666 = vsel %vm117, %v626, 0.0
  %667 = vadd.xlane.f32.xlu0 %v666
  %v668 = vpop.xlane.xlu0 %667
  %v669 = vsel %vm117, %v627, 0.0
  %670 = vadd.xlane.f32.xlu0 %v669
  %v671 = vpop.xlane.xlu0 %670
  %v672 = vsel %vm117, %v628, 0.0
  %673 = vadd.xlane.f32.xlu0 %v672
  %v674 = vpop.xlane.xlu0 %673
  %v675 = vsel %vm117, %v629, 0.0
  %676 = vadd.xlane.f32.xlu0 %v675
  %v677 = vpop.xlane.xlu0 %676
  %v679 = vsel %vm117, %v388, 0
  %v682 = vsel %vm117, %v403, 0
  %v685 = vsel %vm117, %v418, 0
  %v688 = vsel %vm117, %v433, 0
  %v691 = vsel %vm117, %v448, 0
  %v694 = vsel %vm117, %v463, 0
  %v697 = vsel %vm117, %v478, 0
  %v700 = vsel %vm117, %v493, 0
  %v703 = vsel %vm117, %v508, 0
  %v706 = vsel %vm117, %v523, 0
  %v709 = vsel %vm117, %v538, 0
  %v712 = vsel %vm117, %v553, 0
  %v715 = vsel %vm117, %v568, 0
  %v718 = vsel %vm117, %v583, 0
  %v721 = vsel %vm117, %v598, 0
  %v724 = vsel %vm117, %v613, 0
  %v727 = vsel %vm117, %v36, 0
  %v730 = vsel %vm117, %v37, 0
  %v733 = vsel %vm117, %v38, 0
  %v736 = vsel %vm117, %v39, 0
  %v739 = vsel %vm117, %v40, 0
  %v742 = vsel %vm117, %v41, 0
  %v745 = vsel %vm117, %v42, 0
  %v748 = vsel %vm117, %v43, 0
  %v751 = vsel %vm117, %v44, 0
  %v754 = vsel %vm117, %v45, 0
  %v757 = vsel %vm117, %v46, 0
  %v760 = vsel %vm117, %v47, 0
  %v763 = vsel %vm117, %v48, 0
  %v766 = vsel %vm117, %v49, 0
  %v769 = vsel %vm117, %v50, 0
  %v772 = vsel %vm117, %v51, 0
  %v775 = vsel %vm117, %v52, 0
  %v778 = vsel %vm117, %v53, 0
  %v781 = vsel %vm117, %v54, 0
  %v784 = vsel %vm117, %v55, 0
  %v787 = vsel %vm117, %v56, 0
  %v790 = vsel %vm117, %v57, 0
  %v793 = vsel %vm117, %v58, 0
  %v796 = vsel %vm117, %v59, 0
  %v799 = vsel %vm117, %v60, 0
  %v802 = vsel %vm117, %v61, 0
  %v805 = vsel %vm117, %v62, 0
  %v808 = vsel %vm117, %v63, 0
  %v811 = vsel %vm117, %v64, 0
  %v814 = vsel %vm117, %v65, 0
  %v817 = vsel %vm117, %v66, 0
  %v820 = vsel %vm117, %v67, 0
  %822 = vmatpush.xpose.msra.mxu0 %v772
  %823 = vmatpush.xpose.msra.mxu0 %v769
  %824 = vmatpush.xpose.msra.mxu0 %v766
  %825 = vmatpush.xpose.msra.mxu0 %v763
  %826 = vmatpush.xpose.msra.mxu0 %v760
  %827 = vmatpush.xpose.msra.mxu0 %v757
  %828 = vmatpush.xpose.msra.mxu0 %v754
  %829 = vmatpush.xpose.msra.mxu0 %v751
  %830 = vmatpush.xpose.msra.mxu0 %v748
  %831 = vmatpush.xpose.msra.mxu0 %v745
  %832 = vmatpush.xpose.msra.mxu0 %v742
  %833 = vmatpush.xpose.msra.mxu0 %v739
  %834 = vmatpush.xpose.msra.mxu0 %v736
  %835 = vmatpush.xpose.msra.mxu0 %v733
  %836 = vmatpush.xpose.msra.mxu0 %v730
  %837 = vmatpush.xpose.msra.mxu0 %v727
  %838 = vmatmul.f32.gmra.mxu0 %v679
  %v839 = vpop.f32.mrf.mxu0
  %v840 = vadd.f32 0.0, %v839
  %841 = vmatmul.f32.gmra.mxu0 %v682
  %v842 = vpop.f32.mrf.mxu0
  %v843 = vadd.f32 0.0, %v842
  %844 = vmatmul.f32.gmra.mxu0 %v685
  %v845 = vpop.f32.mrf.mxu0
  %v846 = vadd.f32 0.0, %v845
  %847 = vmatmul.f32.gmra.mxu0 %v688
  %v848 = vpop.f32.mrf.mxu0
  %v849 = vadd.f32 0.0, %v848
  %850 = vmatmul.f32.gmra.mxu0 %v691
  %v851 = vpop.f32.mrf.mxu0
  %v852 = vadd.f32 0.0, %v851
  %853 = vmatmul.f32.gmra.mxu0 %v694
  %v854 = vpop.f32.mrf.mxu0
  %v855 = vadd.f32 0.0, %v854
  %856 = vmatmul.f32.gmra.mxu0 %v697
  %v857 = vpop.f32.mrf.mxu0
  %v858 = vadd.f32 0.0, %v857
  %859 = vmatmul.f32.gmra.mxu0 %v700
  %v860 = vpop.f32.mrf.mxu0
  %v861 = vadd.f32 0.0, %v860
  %862 = vmatmul.f32.gmra.mxu0 %v703
  %v863 = vpop.f32.mrf.mxu0
  %v864 = vadd.f32 0.0, %v863
  %865 = vmatmul.f32.gmra.mxu0 %v706
  %v866 = vpop.f32.mrf.mxu0
  %v867 = vadd.f32 0.0, %v866
  %868 = vmatmul.f32.gmra.mxu0 %v709
  %v869 = vpop.f32.mrf.mxu0
  %v870 = vadd.f32 0.0, %v869
  %871 = vmatmul.f32.gmra.mxu0 %v712
  %v872 = vpop.f32.mrf.mxu0
  %v873 = vadd.f32 0.0, %v872
  %874 = vmatmul.f32.gmra.mxu0 %v715
  %v875 = vpop.f32.mrf.mxu0
  %v876 = vadd.f32 0.0, %v875
  %877 = vmatmul.f32.gmra.mxu0 %v718
  %v878 = vpop.f32.mrf.mxu0
  %v879 = vadd.f32 0.0, %v878
  %880 = vmatmul.f32.gmra.mxu0 %v721
  %v881 = vpop.f32.mrf.mxu0
  %v882 = vadd.f32 0.0, %v881
  %883 = vmatmul.f32.gmra.mxu0 %v724
  %v884 = vpop.f32.mrf.mxu0
  %v885 = vadd.f32 0.0, %v884
  %886 = vdwg.mxu0
  %887 = vmatpush.xpose.msra.mxu0 %v820
  %888 = vmatpush.xpose.msra.mxu0 %v817
  %889 = vmatpush.xpose.msra.mxu0 %v814
  %890 = vmatpush.xpose.msra.mxu0 %v811
  %891 = vmatpush.xpose.msra.mxu0 %v808
  %892 = vmatpush.xpose.msra.mxu0 %v805
  %893 = vmatpush.xpose.msra.mxu0 %v802
  %894 = vmatpush.xpose.msra.mxu0 %v799
  %895 = vmatpush.xpose.msra.mxu0 %v796
  %896 = vmatpush.xpose.msra.mxu0 %v793
  %897 = vmatpush.xpose.msra.mxu0 %v790
  %898 = vmatpush.xpose.msra.mxu0 %v787
  %899 = vmatpush.xpose.msra.mxu0 %v784
  %900 = vmatpush.xpose.msra.mxu0 %v781
  %901 = vmatpush.xpose.msra.mxu0 %v778
  %902 = vmatpush.xpose.msra.mxu0 %v775
  %903 = vmatmul.f32.gmra.mxu0 %v679
  %v904 = vpop.f32.mrf.mxu0
  %v905 = vadd.f32 0.0, %v904
  %906 = vmatmul.f32.gmra.mxu0 %v682
  %v907 = vpop.f32.mrf.mxu0
  %v908 = vadd.f32 0.0, %v907
  %909 = vmatmul.f32.gmra.mxu0 %v685
  %v910 = vpop.f32.mrf.mxu0
  %v911 = vadd.f32 0.0, %v910
  %912 = vmatmul.f32.gmra.mxu0 %v688
  %v913 = vpop.f32.mrf.mxu0
  %v914 = vadd.f32 0.0, %v913
  %915 = vmatmul.f32.gmra.mxu0 %v691
  %v916 = vpop.f32.mrf.mxu0
  %v917 = vadd.f32 0.0, %v916
  %918 = vmatmul.f32.gmra.mxu0 %v694
  %v919 = vpop.f32.mrf.mxu0
  %v920 = vadd.f32 0.0, %v919
  %921 = vmatmul.f32.gmra.mxu0 %v697
  %v922 = vpop.f32.mrf.mxu0
  %v923 = vadd.f32 0.0, %v922
  %924 = vmatmul.f32.gmra.mxu0 %v700
  %v925 = vpop.f32.mrf.mxu0
  %v926 = vadd.f32 0.0, %v925
  %927 = vmatmul.f32.gmra.mxu0 %v703
  %v928 = vpop.f32.mrf.mxu0
  %v929 = vadd.f32 0.0, %v928
  %930 = vmatmul.f32.gmra.mxu0 %v706
  %v931 = vpop.f32.mrf.mxu0
  %v932 = vadd.f32 0.0, %v931
  %933 = vmatmul.f32.gmra.mxu0 %v709
  %v934 = vpop.f32.mrf.mxu0
  %v935 = vadd.f32 0.0, %v934
  %936 = vmatmul.f32.gmra.mxu0 %v712
  %v937 = vpop.f32.mrf.mxu0
  %v938 = vadd.f32 0.0, %v937
  %939 = vmatmul.f32.gmra.mxu0 %v715
  %v940 = vpop.f32.mrf.mxu0
  %v941 = vadd.f32 0.0, %v940
  %942 = vmatmul.f32.gmra.mxu0 %v718
  %v943 = vpop.f32.mrf.mxu0
  %v944 = vadd.f32 0.0, %v943
  %945 = vmatmul.f32.gmra.mxu0 %v721
  %v946 = vpop.f32.mrf.mxu0
  %v947 = vadd.f32 0.0, %v946
  %948 = vmatmul.f32.gmra.mxu0 %v724
  %v949 = vpop.f32.mrf.mxu0
  %v950 = vadd.f32 0.0, %v949
  %951 = vdwg.mxu0
  %v953 = vperm.slane %v68, 0
  %v954 = vperm.slane %v68, 1
  %v957 = vadd.f32 %v632, %v953
  %v958 = vadd.f32 %v632, %v954
  %v959 = vadd.f32 %v635, %v953
  %v960 = vadd.f32 %v635, %v954
  %v961 = vadd.f32 %v638, %v953
  %v962 = vadd.f32 %v638, %v954
  %v963 = vadd.f32 %v641, %v953
  %v964 = vadd.f32 %v641, %v954
  %v965 = vadd.f32 %v644, %v953
  %v966 = vadd.f32 %v644, %v954
  %v967 = vadd.f32 %v647, %v953
  %v968 = vadd.f32 %v647, %v954
  %v969 = vadd.f32 %v650, %v953
  %v970 = vadd.f32 %v650, %v954
  %v971 = vadd.f32 %v653, %v953
  %v972 = vadd.f32 %v653, %v954
  %v973 = vadd.f32 %v656, %v953
  %v974 = vadd.f32 %v656, %v954
  %v975 = vadd.f32 %v659, %v953
  %v976 = vadd.f32 %v659, %v954
  %v977 = vadd.f32 %v662, %v953
  %v978 = vadd.f32 %v662, %v954
  %v979 = vadd.f32 %v665, %v953
  %v980 = vadd.f32 %v665, %v954
  %v981 = vadd.f32 %v668, %v953
  %v982 = vadd.f32 %v668, %v954
  %v983 = vadd.f32 %v671, %v953
  %v984 = vadd.f32 %v671, %v954
  %v985 = vadd.f32 %v674, %v953
  %v986 = vadd.f32 %v674, %v954
  %v987 = vadd.f32 %v677, %v953
  %v988 = vadd.f32 %v677, %v954
  %v989 = vmul.f32 %v840, 2.0
  %v990 = vmul.f32 %v905, 2.0
  %v991 = vmul.f32 %v843, 2.0
  %v992 = vmul.f32 %v908, 2.0
  %v993 = vmul.f32 %v846, 2.0
  %v994 = vmul.f32 %v911, 2.0
  %v995 = vmul.f32 %v849, 2.0
  %v996 = vmul.f32 %v914, 2.0
  %v997 = vmul.f32 %v852, 2.0
  %v998 = vmul.f32 %v917, 2.0
  %v999 = vmul.f32 %v855, 2.0
  %v1000 = vmul.f32 %v920, 2.0
  %v1001 = vmul.f32 %v858, 2.0
  %v1002 = vmul.f32 %v923, 2.0
  %v1003 = vmul.f32 %v861, 2.0
  %v1004 = vmul.f32 %v926, 2.0
  %v1005 = vmul.f32 %v864, 2.0
  %v1006 = vmul.f32 %v929, 2.0
  %v1007 = vmul.f32 %v867, 2.0
  %v1008 = vmul.f32 %v932, 2.0
  %v1009 = vmul.f32 %v870, 2.0
  %v1010 = vmul.f32 %v935, 2.0
  %v1011 = vmul.f32 %v873, 2.0
  %v1012 = vmul.f32 %v938, 2.0
  %v1013 = vmul.f32 %v876, 2.0
  %v1014 = vmul.f32 %v941, 2.0
  %v1015 = vmul.f32 %v879, 2.0
  %v1016 = vmul.f32 %v944, 2.0
  %v1017 = vmul.f32 %v882, 2.0
  %v1018 = vmul.f32 %v947, 2.0
  %v1019 = vmul.f32 %v885, 2.0
  %v1020 = vmul.f32 %v950, 2.0
  %v1021 = vsub.f32 %v957, %v989
  %v1022 = vsub.f32 %v958, %v990
  %v1023 = vsub.f32 %v959, %v991
  %v1024 = vsub.f32 %v960, %v992
  %v1025 = vsub.f32 %v961, %v993
  %v1026 = vsub.f32 %v962, %v994
  %v1027 = vsub.f32 %v963, %v995
  %v1028 = vsub.f32 %v964, %v996
  %v1029 = vsub.f32 %v965, %v997
  %v1030 = vsub.f32 %v966, %v998
  %v1031 = vsub.f32 %v967, %v999
  %v1032 = vsub.f32 %v968, %v1000
  %v1033 = vsub.f32 %v969, %v1001
  %v1034 = vsub.f32 %v970, %v1002
  %v1035 = vsub.f32 %v971, %v1003
  %v1036 = vsub.f32 %v972, %v1004
  %v1037 = vsub.f32 %v973, %v1005
  %v1038 = vsub.f32 %v974, %v1006
  %v1039 = vsub.f32 %v975, %v1007
  %v1040 = vsub.f32 %v976, %v1008
  %v1041 = vsub.f32 %v977, %v1009
  %v1042 = vsub.f32 %v978, %v1010
  %v1043 = vsub.f32 %v979, %v1011
  %v1044 = vsub.f32 %v980, %v1012
  %v1045 = vsub.f32 %v981, %v1013
  %v1046 = vsub.f32 %v982, %v1014
  %v1047 = vsub.f32 %v983, %v1015
  %v1048 = vsub.f32 %v984, %v1016
  %v1049 = vsub.f32 %v985, %v1017
  %v1050 = vsub.f32 %v986, %v1018
  %v1051 = vsub.f32 %v987, %v1019
  %v1052 = vsub.f32 %v988, %v1020
  %v1053 = vmin.f32 %v1021, %v1022
  %1054 = vmin.xlane.f32.xlu0 %v1053
  %v1055 = vpop.xlane.xlu0 %1054
  %v1056 = vmin.f32 %v1023, %v1024
  %1057 = vmin.xlane.f32.xlu0 %v1056
  %v1058 = vpop.xlane.xlu0 %1057
  %v1059 = vmin.f32 %v1025, %v1026
  %1060 = vmin.xlane.f32.xlu0 %v1059
  %v1061 = vpop.xlane.xlu0 %1060
  %v1062 = vmin.f32 %v1027, %v1028
  %1063 = vmin.xlane.f32.xlu0 %v1062
  %v1064 = vpop.xlane.xlu0 %1063
  %v1065 = vmin.f32 %v1029, %v1030
  %1066 = vmin.xlane.f32.xlu0 %v1065
  %v1067 = vpop.xlane.xlu0 %1066
  %v1068 = vmin.f32 %v1031, %v1032
  %1069 = vmin.xlane.f32.xlu0 %v1068
  %v1070 = vpop.xlane.xlu0 %1069
  %v1071 = vmin.f32 %v1033, %v1034
  %1072 = vmin.xlane.f32.xlu0 %v1071
  %v1073 = vpop.xlane.xlu0 %1072
  %v1074 = vmin.f32 %v1035, %v1036
  %1075 = vmin.xlane.f32.xlu0 %v1074
  %v1076 = vpop.xlane.xlu0 %1075
  %v1077 = vmin.f32 %v1037, %v1038
  %1078 = vmin.xlane.f32.xlu0 %v1077
  %v1079 = vpop.xlane.xlu0 %1078
  %v1080 = vmin.f32 %v1039, %v1040
  %1081 = vmin.xlane.f32.xlu0 %v1080
  %v1082 = vpop.xlane.xlu0 %1081
  %v1083 = vmin.f32 %v1041, %v1042
  %1084 = vmin.xlane.f32.xlu0 %v1083
  %v1085 = vpop.xlane.xlu0 %1084
  %v1086 = vmin.f32 %v1043, %v1044
  %1087 = vmin.xlane.f32.xlu0 %v1086
  %v1088 = vpop.xlane.xlu0 %1087
  %v1089 = vmin.f32 %v1045, %v1046
  %1090 = vmin.xlane.f32.xlu0 %v1089
  %v1091 = vpop.xlane.xlu0 %1090
  %v1092 = vmin.f32 %v1047, %v1048
  %1093 = vmin.xlane.f32.xlu0 %v1092
  %v1094 = vpop.xlane.xlu0 %1093
  %v1095 = vmin.f32 %v1049, %v1050
  %1096 = vmin.xlane.f32.xlu0 %v1095
  %v1097 = vpop.xlane.xlu0 %1096
  %v1098 = vmin.f32 %v1051, %v1052
  %1099 = vmin.xlane.f32.xlu0 %v1098
  %v1100 = vpop.xlane.xlu0 %1099
  %v1101 = vlaneseq
  %v1102 = vand.u32 %v1101, 127
  %v1103 = vadd.s32 %v1102, 128
  %vm1104 = vcmp.le.f32.partialorder %v1021, %v1055
  %vm1105 = vcmp.le.f32.partialorder %v1022, %v1055
  %vm1106 = vcmp.le.f32.partialorder %v1023, %v1058
  %vm1107 = vcmp.le.f32.partialorder %v1024, %v1058
  %vm1108 = vcmp.le.f32.partialorder %v1025, %v1061
  %vm1109 = vcmp.le.f32.partialorder %v1026, %v1061
  %vm1110 = vcmp.le.f32.partialorder %v1027, %v1064
  %vm1111 = vcmp.le.f32.partialorder %v1028, %v1064
  %vm1112 = vcmp.le.f32.partialorder %v1029, %v1067
  %vm1113 = vcmp.le.f32.partialorder %v1030, %v1067
  %vm1114 = vcmp.le.f32.partialorder %v1031, %v1070
  %vm1115 = vcmp.le.f32.partialorder %v1032, %v1070
  %vm1116 = vcmp.le.f32.partialorder %v1033, %v1073
  %vm1117 = vcmp.le.f32.partialorder %v1034, %v1073
  %vm1118 = vcmp.le.f32.partialorder %v1035, %v1076
  %vm1119 = vcmp.le.f32.partialorder %v1036, %v1076
  %vm1120 = vcmp.le.f32.partialorder %v1037, %v1079
  %vm1121 = vcmp.le.f32.partialorder %v1038, %v1079
  %vm1122 = vcmp.le.f32.partialorder %v1039, %v1082
  %vm1123 = vcmp.le.f32.partialorder %v1040, %v1082
  %vm1124 = vcmp.le.f32.partialorder %v1041, %v1085
  %vm1125 = vcmp.le.f32.partialorder %v1042, %v1085
  %vm1126 = vcmp.le.f32.partialorder %v1043, %v1088
  %vm1127 = vcmp.le.f32.partialorder %v1044, %v1088
  %vm1128 = vcmp.le.f32.partialorder %v1045, %v1091
  %vm1129 = vcmp.le.f32.partialorder %v1046, %v1091
  %vm1130 = vcmp.le.f32.partialorder %v1047, %v1094
  %vm1131 = vcmp.le.f32.partialorder %v1048, %v1094
  %vm1132 = vcmp.le.f32.partialorder %v1049, %v1097
  %vm1133 = vcmp.le.f32.partialorder %v1050, %v1097
  %vm1134 = vcmp.le.f32.partialorder %v1051, %v1100
  %vm1135 = vcmp.le.f32.partialorder %v1052, %v1100
  %v1136 = vsel %vm1104, %v1102, 256
  %v1137 = vsel %vm1105, %v1103, 256
  %v1138 = vsel %vm1106, %v1102, 256
  %v1139 = vsel %vm1107, %v1103, 256
  %v1140 = vsel %vm1108, %v1102, 256
  %v1141 = vsel %vm1109, %v1103, 256
  %v1142 = vsel %vm1110, %v1102, 256
  %v1143 = vsel %vm1111, %v1103, 256
  %v1144 = vsel %vm1112, %v1102, 256
  %v1145 = vsel %vm1113, %v1103, 256
  %v1146 = vsel %vm1114, %v1102, 256
  %v1147 = vsel %vm1115, %v1103, 256
  %v1148 = vsel %vm1116, %v1102, 256
  %v1149 = vsel %vm1117, %v1103, 256
  %v1150 = vsel %vm1118, %v1102, 256
  %v1151 = vsel %vm1119, %v1103, 256
  %v1152 = vsel %vm1120, %v1102, 256
  %v1153 = vsel %vm1121, %v1103, 256
  %v1154 = vsel %vm1122, %v1102, 256
  %v1155 = vsel %vm1123, %v1103, 256
  %v1156 = vsel %vm1124, %v1102, 256
  %v1157 = vsel %vm1125, %v1103, 256
  %v1158 = vsel %vm1126, %v1102, 256
  %v1159 = vsel %vm1127, %v1103, 256
  %v1160 = vsel %vm1128, %v1102, 256
  %v1161 = vsel %vm1129, %v1103, 256
  %v1162 = vsel %vm1130, %v1102, 256
  %v1163 = vsel %vm1131, %v1103, 256
  %v1164 = vsel %vm1132, %v1102, 256
  %v1165 = vsel %vm1133, %v1103, 256
  %v1166 = vsel %vm1134, %v1102, 256
  %v1167 = vsel %vm1135, %v1103, 256
  %vm1168 = vcmp.lt.s32.totalorder %v1136, %v1137
  %v1169 = vsel %vm1168, %v1136, %v1137
  %v1170 = vand.u32 %v1169, 65535
  %v1171 = vshra.s32 %v1169, 16
  %v1172 = vcvt.s32.f32 %v1170
  %v1173 = vcvt.s32.f32 %v1171
  %1174 = vmin.xlane.f32.xlu0 %v1173
  %v1175 = vpop.xlane.xlu0 %1174
  %vm1176 = vcmp.eq.f32.partialorder %v1173, %v1175
  %v1177 = vsel %vm1176, %v1172, inf
  %1178 = vmin.xlane.f32.xlu0 %v1177
  %v1179 = vpop.xlane.xlu0 %1178
  %v1180 = vcvt.f32.s32 %v1179
  %v1181 = vcvt.f32.s32 %v1175
  %v1182 = vshll.u32 %v1181, 16
  %v1183 = vadd.s32 %v1182, %v1180
  %vm1184 = vcmp.lt.s32.totalorder %v1138, %v1139
  %v1185 = vsel %vm1184, %v1138, %v1139
  %v1186 = vand.u32 %v1185, 65535
  %v1187 = vshra.s32 %v1185, 16
  %v1188 = vcvt.s32.f32 %v1186
  %v1189 = vcvt.s32.f32 %v1187
  %1190 = vmin.xlane.f32.xlu0 %v1189
  %v1191 = vpop.xlane.xlu0 %1190
  %vm1192 = vcmp.eq.f32.partialorder %v1189, %v1191
  %v1193 = vsel %vm1192, %v1188, inf
  %1194 = vmin.xlane.f32.xlu0 %v1193
  %v1195 = vpop.xlane.xlu0 %1194
  %v1196 = vcvt.f32.s32 %v1195
  %v1197 = vcvt.f32.s32 %v1191
  %v1198 = vshll.u32 %v1197, 16
  %v1199 = vadd.s32 %v1198, %v1196
  %vm1200 = vcmp.lt.s32.totalorder %v1140, %v1141
  %v1201 = vsel %vm1200, %v1140, %v1141
  %v1202 = vand.u32 %v1201, 65535
  %v1203 = vshra.s32 %v1201, 16
  %v1204 = vcvt.s32.f32 %v1202
  %v1205 = vcvt.s32.f32 %v1203
  %1206 = vmin.xlane.f32.xlu0 %v1205
  %v1207 = vpop.xlane.xlu0 %1206
  %vm1208 = vcmp.eq.f32.partialorder %v1205, %v1207
  %v1209 = vsel %vm1208, %v1204, inf
  %1210 = vmin.xlane.f32.xlu0 %v1209
  %v1211 = vpop.xlane.xlu0 %1210
  %v1212 = vcvt.f32.s32 %v1211
  %v1213 = vcvt.f32.s32 %v1207
  %v1214 = vshll.u32 %v1213, 16
  %v1215 = vadd.s32 %v1214, %v1212
  %vm1216 = vcmp.lt.s32.totalorder %v1142, %v1143
  %v1217 = vsel %vm1216, %v1142, %v1143
  %v1218 = vand.u32 %v1217, 65535
  %v1219 = vshra.s32 %v1217, 16
  %v1220 = vcvt.s32.f32 %v1218
  %v1221 = vcvt.s32.f32 %v1219
  %1222 = vmin.xlane.f32.xlu0 %v1221
  %v1223 = vpop.xlane.xlu0 %1222
  %vm1224 = vcmp.eq.f32.partialorder %v1221, %v1223
  %v1225 = vsel %vm1224, %v1220, inf
  %1226 = vmin.xlane.f32.xlu0 %v1225
  %v1227 = vpop.xlane.xlu0 %1226
  %v1228 = vcvt.f32.s32 %v1227
  %v1229 = vcvt.f32.s32 %v1223
  %v1230 = vshll.u32 %v1229, 16
  %v1231 = vadd.s32 %v1230, %v1228
  %vm1232 = vcmp.lt.s32.totalorder %v1144, %v1145
  %v1233 = vsel %vm1232, %v1144, %v1145
  %v1234 = vand.u32 %v1233, 65535
  %v1235 = vshra.s32 %v1233, 16
  %v1236 = vcvt.s32.f32 %v1234
  %v1237 = vcvt.s32.f32 %v1235
  %1238 = vmin.xlane.f32.xlu0 %v1237
  %v1239 = vpop.xlane.xlu0 %1238
  %vm1240 = vcmp.eq.f32.partialorder %v1237, %v1239
  %v1241 = vsel %vm1240, %v1236, inf
  %1242 = vmin.xlane.f32.xlu0 %v1241
  %v1243 = vpop.xlane.xlu0 %1242
  %v1244 = vcvt.f32.s32 %v1243
  %v1245 = vcvt.f32.s32 %v1239
  %v1246 = vshll.u32 %v1245, 16
  %v1247 = vadd.s32 %v1246, %v1244
  %vm1248 = vcmp.lt.s32.totalorder %v1146, %v1147
  %v1249 = vsel %vm1248, %v1146, %v1147
  %v1250 = vand.u32 %v1249, 65535
  %v1251 = vshra.s32 %v1249, 16
  %v1252 = vcvt.s32.f32 %v1250
  %v1253 = vcvt.s32.f32 %v1251
  %1254 = vmin.xlane.f32.xlu0 %v1253
  %v1255 = vpop.xlane.xlu0 %1254
  %vm1256 = vcmp.eq.f32.partialorder %v1253, %v1255
  %v1257 = vsel %vm1256, %v1252, inf
  %1258 = vmin.xlane.f32.xlu0 %v1257
  %v1259 = vpop.xlane.xlu0 %1258
  %v1260 = vcvt.f32.s32 %v1259
  %v1261 = vcvt.f32.s32 %v1255
  %v1262 = vshll.u32 %v1261, 16
  %v1263 = vadd.s32 %v1262, %v1260
  %vm1264 = vcmp.lt.s32.totalorder %v1148, %v1149
  %v1265 = vsel %vm1264, %v1148, %v1149
  %v1266 = vand.u32 %v1265, 65535
  %v1267 = vshra.s32 %v1265, 16
  %v1268 = vcvt.s32.f32 %v1266
  %v1269 = vcvt.s32.f32 %v1267
  %1270 = vmin.xlane.f32.xlu0 %v1269
  %v1271 = vpop.xlane.xlu0 %1270
  %vm1272 = vcmp.eq.f32.partialorder %v1269, %v1271
  %v1273 = vsel %vm1272, %v1268, inf
  %1274 = vmin.xlane.f32.xlu0 %v1273
  %v1275 = vpop.xlane.xlu0 %1274
  %v1276 = vcvt.f32.s32 %v1275
  %v1277 = vcvt.f32.s32 %v1271
  %v1278 = vshll.u32 %v1277, 16
  %v1279 = vadd.s32 %v1278, %v1276
  %vm1280 = vcmp.lt.s32.totalorder %v1150, %v1151
  %v1281 = vsel %vm1280, %v1150, %v1151
  %v1282 = vand.u32 %v1281, 65535
  %v1283 = vshra.s32 %v1281, 16
  %v1284 = vcvt.s32.f32 %v1282
  %v1285 = vcvt.s32.f32 %v1283
  %1286 = vmin.xlane.f32.xlu0 %v1285
  %v1287 = vpop.xlane.xlu0 %1286
  %vm1288 = vcmp.eq.f32.partialorder %v1285, %v1287
  %v1289 = vsel %vm1288, %v1284, inf
  %1290 = vmin.xlane.f32.xlu0 %v1289
  %v1291 = vpop.xlane.xlu0 %1290
  %v1292 = vcvt.f32.s32 %v1291
  %v1293 = vcvt.f32.s32 %v1287
  %v1294 = vshll.u32 %v1293, 16
  %v1295 = vadd.s32 %v1294, %v1292
  %vm1296 = vcmp.lt.s32.totalorder %v1152, %v1153
  %v1297 = vsel %vm1296, %v1152, %v1153
  %v1298 = vand.u32 %v1297, 65535
  %v1299 = vshra.s32 %v1297, 16
  %v1300 = vcvt.s32.f32 %v1298
  %v1301 = vcvt.s32.f32 %v1299
  %1302 = vmin.xlane.f32.xlu0 %v1301
  %v1303 = vpop.xlane.xlu0 %1302
  %vm1304 = vcmp.eq.f32.partialorder %v1301, %v1303
  %v1305 = vsel %vm1304, %v1300, inf
  %1306 = vmin.xlane.f32.xlu0 %v1305
  %v1307 = vpop.xlane.xlu0 %1306
  %v1308 = vcvt.f32.s32 %v1307
  %v1309 = vcvt.f32.s32 %v1303
  %v1310 = vshll.u32 %v1309, 16
  %v1311 = vadd.s32 %v1310, %v1308
  %vm1312 = vcmp.lt.s32.totalorder %v1154, %v1155
  %v1313 = vsel %vm1312, %v1154, %v1155
  %v1314 = vand.u32 %v1313, 65535
  %v1315 = vshra.s32 %v1313, 16
  %v1316 = vcvt.s32.f32 %v1314
  %v1317 = vcvt.s32.f32 %v1315
  %1318 = vmin.xlane.f32.xlu0 %v1317
  %v1319 = vpop.xlane.xlu0 %1318
  %vm1320 = vcmp.eq.f32.partialorder %v1317, %v1319
  %v1321 = vsel %vm1320, %v1316, inf
  %1322 = vmin.xlane.f32.xlu0 %v1321
  %v1323 = vpop.xlane.xlu0 %1322
  %v1324 = vcvt.f32.s32 %v1323
  %v1325 = vcvt.f32.s32 %v1319
  %v1326 = vshll.u32 %v1325, 16
  %v1327 = vadd.s32 %v1326, %v1324
  %vm1328 = vcmp.lt.s32.totalorder %v1156, %v1157
  %v1329 = vsel %vm1328, %v1156, %v1157
  %v1330 = vand.u32 %v1329, 65535
  %v1331 = vshra.s32 %v1329, 16
  %v1332 = vcvt.s32.f32 %v1330
  %v1333 = vcvt.s32.f32 %v1331
  %1334 = vmin.xlane.f32.xlu0 %v1333
  %v1335 = vpop.xlane.xlu0 %1334
  %vm1336 = vcmp.eq.f32.partialorder %v1333, %v1335
  %v1337 = vsel %vm1336, %v1332, inf
  %1338 = vmin.xlane.f32.xlu0 %v1337
  %v1339 = vpop.xlane.xlu0 %1338
  %v1340 = vcvt.f32.s32 %v1339
  %v1341 = vcvt.f32.s32 %v1335
  %v1342 = vshll.u32 %v1341, 16
  %v1343 = vadd.s32 %v1342, %v1340
  %vm1344 = vcmp.lt.s32.totalorder %v1158, %v1159
  %v1345 = vsel %vm1344, %v1158, %v1159
  %v1346 = vand.u32 %v1345, 65535
  %v1347 = vshra.s32 %v1345, 16
  %v1348 = vcvt.s32.f32 %v1346
  %v1349 = vcvt.s32.f32 %v1347
  %1350 = vmin.xlane.f32.xlu0 %v1349
  %v1351 = vpop.xlane.xlu0 %1350
  %vm1352 = vcmp.eq.f32.partialorder %v1349, %v1351
  %v1353 = vsel %vm1352, %v1348, inf
  %1354 = vmin.xlane.f32.xlu0 %v1353
  %v1355 = vpop.xlane.xlu0 %1354
  %v1356 = vcvt.f32.s32 %v1355
  %v1357 = vcvt.f32.s32 %v1351
  %v1358 = vshll.u32 %v1357, 16
  %v1359 = vadd.s32 %v1358, %v1356
  %vm1360 = vcmp.lt.s32.totalorder %v1160, %v1161
  %v1361 = vsel %vm1360, %v1160, %v1161
  %v1362 = vand.u32 %v1361, 65535
  %v1363 = vshra.s32 %v1361, 16
  %v1364 = vcvt.s32.f32 %v1362
  %v1365 = vcvt.s32.f32 %v1363
  %1366 = vmin.xlane.f32.xlu0 %v1365
  %v1367 = vpop.xlane.xlu0 %1366
  %vm1368 = vcmp.eq.f32.partialorder %v1365, %v1367
  %v1369 = vsel %vm1368, %v1364, inf
  %1370 = vmin.xlane.f32.xlu0 %v1369
  %v1371 = vpop.xlane.xlu0 %1370
  %v1372 = vcvt.f32.s32 %v1371
  %v1373 = vcvt.f32.s32 %v1367
  %v1374 = vshll.u32 %v1373, 16
  %v1375 = vadd.s32 %v1374, %v1372
  %vm1376 = vcmp.lt.s32.totalorder %v1162, %v1163
  %v1377 = vsel %vm1376, %v1162, %v1163
  %v1378 = vand.u32 %v1377, 65535
  %v1379 = vshra.s32 %v1377, 16
  %v1380 = vcvt.s32.f32 %v1378
  %v1381 = vcvt.s32.f32 %v1379
  %1382 = vmin.xlane.f32.xlu0 %v1381
  %v1383 = vpop.xlane.xlu0 %1382
  %vm1384 = vcmp.eq.f32.partialorder %v1381, %v1383
  %v1385 = vsel %vm1384, %v1380, inf
  %1386 = vmin.xlane.f32.xlu0 %v1385
  %v1387 = vpop.xlane.xlu0 %1386
  %v1388 = vcvt.f32.s32 %v1387
  %v1389 = vcvt.f32.s32 %v1383
  %v1390 = vshll.u32 %v1389, 16
  %v1391 = vadd.s32 %v1390, %v1388
  %vm1392 = vcmp.lt.s32.totalorder %v1164, %v1165
  %v1393 = vsel %vm1392, %v1164, %v1165
  %v1394 = vand.u32 %v1393, 65535
  %v1395 = vshra.s32 %v1393, 16
  %v1396 = vcvt.s32.f32 %v1394
  %v1397 = vcvt.s32.f32 %v1395
  %1398 = vmin.xlane.f32.xlu0 %v1397
  %v1399 = vpop.xlane.xlu0 %1398
  %vm1400 = vcmp.eq.f32.partialorder %v1397, %v1399
  %v1401 = vsel %vm1400, %v1396, inf
  %1402 = vmin.xlane.f32.xlu0 %v1401
  %v1403 = vpop.xlane.xlu0 %1402
  %v1404 = vcvt.f32.s32 %v1403
  %v1405 = vcvt.f32.s32 %v1399
  %v1406 = vshll.u32 %v1405, 16
  %v1407 = vadd.s32 %v1406, %v1404
  %vm1408 = vcmp.lt.s32.totalorder %v1166, %v1167
  %v1409 = vsel %vm1408, %v1166, %v1167
  %v1410 = vand.u32 %v1409, 65535
  %v1411 = vshra.s32 %v1409, 16
  %v1412 = vcvt.s32.f32 %v1410
  %v1413 = vcvt.s32.f32 %v1411
  %1414 = vmin.xlane.f32.xlu0 %v1413
  %v1415 = vpop.xlane.xlu0 %1414
  %vm1416 = vcmp.eq.f32.partialorder %v1413, %v1415
  %v1417 = vsel %vm1416, %v1412, inf
  %1418 = vmin.xlane.f32.xlu0 %v1417
  %v1419 = vpop.xlane.xlu0 %1418
  %v1420 = vcvt.f32.s32 %v1419
  %v1421 = vcvt.f32.s32 %v1415
  %v1422 = vshll.u32 %v1421, 16
  %v1423 = vadd.s32 %v1422, %v1420
  %vm1424 = vcmp.eq.s32.totalorder %v1102, %v1183
  %vm1425 = vcmp.eq.s32.totalorder %v1103, %v1183
  %vm1426 = vcmp.eq.s32.totalorder %v1102, %v1199
  %vm1427 = vcmp.eq.s32.totalorder %v1103, %v1199
  %vm1428 = vcmp.eq.s32.totalorder %v1102, %v1215
  %vm1429 = vcmp.eq.s32.totalorder %v1103, %v1215
  %vm1430 = vcmp.eq.s32.totalorder %v1102, %v1231
  %vm1431 = vcmp.eq.s32.totalorder %v1103, %v1231
  %vm1432 = vcmp.eq.s32.totalorder %v1102, %v1247
  %vm1433 = vcmp.eq.s32.totalorder %v1103, %v1247
  %vm1434 = vcmp.eq.s32.totalorder %v1102, %v1263
  %vm1435 = vcmp.eq.s32.totalorder %v1103, %v1263
  %vm1436 = vcmp.eq.s32.totalorder %v1102, %v1279
  %vm1437 = vcmp.eq.s32.totalorder %v1103, %v1279
  %vm1438 = vcmp.eq.s32.totalorder %v1102, %v1295
  %vm1439 = vcmp.eq.s32.totalorder %v1103, %v1295
  %vm1440 = vcmp.eq.s32.totalorder %v1102, %v1311
  %vm1441 = vcmp.eq.s32.totalorder %v1103, %v1311
  %vm1442 = vcmp.eq.s32.totalorder %v1102, %v1327
  %vm1443 = vcmp.eq.s32.totalorder %v1103, %v1327
  %vm1444 = vcmp.eq.s32.totalorder %v1102, %v1343
  %vm1445 = vcmp.eq.s32.totalorder %v1103, %v1343
  %vm1446 = vcmp.eq.s32.totalorder %v1102, %v1359
  %vm1447 = vcmp.eq.s32.totalorder %v1103, %v1359
  %vm1448 = vcmp.eq.s32.totalorder %v1102, %v1375
  %vm1449 = vcmp.eq.s32.totalorder %v1103, %v1375
  %vm1450 = vcmp.eq.s32.totalorder %v1102, %v1391
  %vm1451 = vcmp.eq.s32.totalorder %v1103, %v1391
  %vm1452 = vcmp.eq.s32.totalorder %v1102, %v1407
  %vm1453 = vcmp.eq.s32.totalorder %v1103, %v1407
  %vm1454 = vcmp.eq.s32.totalorder %v1102, %v1423
  %vm1455 = vcmp.eq.s32.totalorder %v1103, %v1423
  %v1456 = vsel %vm1424, 1, 0
  %v1457 = vsel %vm1425, 1, 0
  %v1458 = vsel %vm1426, 1, 0
  %v1459 = vsel %vm1427, 1, 0
  %v1460 = vsel %vm1428, 1, 0
  %v1461 = vsel %vm1429, 1, 0
  %v1462 = vsel %vm1430, 1, 0
  %v1463 = vsel %vm1431, 1, 0
  %v1464 = vsel %vm1432, 1, 0
  %v1465 = vsel %vm1433, 1, 0
  %v1466 = vsel %vm1434, 1, 0
  %v1467 = vsel %vm1435, 1, 0
  %v1468 = vsel %vm1436, 1, 0
  %v1469 = vsel %vm1437, 1, 0
  %v1470 = vsel %vm1438, 1, 0
  %v1471 = vsel %vm1439, 1, 0
  %v1472 = vsel %vm1440, 1, 0
  %v1473 = vsel %vm1441, 1, 0
  %v1474 = vsel %vm1442, 1, 0
  %v1475 = vsel %vm1443, 1, 0
  %v1476 = vsel %vm1444, 1, 0
  %v1477 = vsel %vm1445, 1, 0
  %v1478 = vsel %vm1446, 1, 0
  %v1479 = vsel %vm1447, 1, 0
  %v1480 = vsel %vm1448, 1, 0
  %v1481 = vsel %vm1449, 1, 0
  %v1482 = vsel %vm1450, 1, 0
  %v1483 = vsel %vm1451, 1, 0
  %v1484 = vsel %vm1452, 1, 0
  %v1485 = vsel %vm1453, 1, 0
  %v1486 = vsel %vm1454, 1, 0
  %v1487 = vsel %vm1455, 1, 0
  %v1488 = vcvt.s32.f32 %v1456
  %v1489 = vcvt.s32.f32 %v1457
  %v1490 = vcvt.s32.f32 %v1458
  %v1491 = vcvt.s32.f32 %v1459
  %v1492 = vcvt.s32.f32 %v1460
  %v1493 = vcvt.s32.f32 %v1461
  %v1494 = vcvt.s32.f32 %v1462
  %v1495 = vcvt.s32.f32 %v1463
  %v1496 = vcvt.s32.f32 %v1464
  %v1497 = vcvt.s32.f32 %v1465
  %v1498 = vcvt.s32.f32 %v1466
  %v1499 = vcvt.s32.f32 %v1467
  %v1500 = vcvt.s32.f32 %v1468
  %v1501 = vcvt.s32.f32 %v1469
  %v1502 = vcvt.s32.f32 %v1470
  %v1503 = vcvt.s32.f32 %v1471
  %v1504 = vcvt.s32.f32 %v1472
  %v1505 = vcvt.s32.f32 %v1473
  %v1506 = vcvt.s32.f32 %v1474
  %v1507 = vcvt.s32.f32 %v1475
  %v1508 = vcvt.s32.f32 %v1476
  %v1509 = vcvt.s32.f32 %v1477
  %v1510 = vcvt.s32.f32 %v1478
  %v1511 = vcvt.s32.f32 %v1479
  %v1512 = vcvt.s32.f32 %v1480
  %v1513 = vcvt.s32.f32 %v1481
  %v1514 = vcvt.s32.f32 %v1482
  %v1515 = vcvt.s32.f32 %v1483
  %v1516 = vcvt.s32.f32 %v1484
  %v1517 = vcvt.s32.f32 %v1485
  %v1518 = vcvt.s32.f32 %v1486
  %v1519 = vcvt.s32.f32 %v1487
  %1520 = vmatpush.msra.mxu0 %v84
  %1521 = vmatpush.msra.mxu0 %v83
  %1522 = vmatpush.msra.mxu0 %v82
  %1523 = vmatpush.msra.mxu0 %v81
  %1524 = vmatpush.msra.mxu0 %v80
  %1525 = vmatpush.msra.mxu0 %v79
  %1526 = vmatpush.msra.mxu0 %v78
  %1527 = vmatpush.msra.mxu0 %v77
  %1528 = vmatpush.msra.mxu0 %v76
  %1529 = vmatpush.msra.mxu0 %v75
  %1530 = vmatpush.msra.mxu0 %v74
  %1531 = vmatpush.msra.mxu0 %v73
  %1532 = vmatpush.msra.mxu0 %v72
  %1533 = vmatpush.msra.mxu0 %v71
  %1534 = vmatpush.msra.mxu0 %v70
  %1535 = vmatpush.msra.mxu0 %v69
  %1536 = vmatmul.f32.gmra.mxu0 %v1488
  %v1537 = vpop.f32.mrf.mxu0
  %v1538 = vadd.f32 0.0, %v1537
  %1539 = vmatmul.f32.gmra.mxu0 %v1490
  %v1540 = vpop.f32.mrf.mxu0
  %v1541 = vadd.f32 0.0, %v1540
  %1542 = vmatmul.f32.gmra.mxu0 %v1492
  %v1543 = vpop.f32.mrf.mxu0
  %v1544 = vadd.f32 0.0, %v1543
  %1545 = vmatmul.f32.gmra.mxu0 %v1494
  %v1546 = vpop.f32.mrf.mxu0
  %v1547 = vadd.f32 0.0, %v1546
  %1548 = vmatmul.f32.gmra.mxu0 %v1496
  %v1549 = vpop.f32.mrf.mxu0
  %v1550 = vadd.f32 0.0, %v1549
  %1551 = vmatmul.f32.gmra.mxu0 %v1498
  %v1552 = vpop.f32.mrf.mxu0
  %v1553 = vadd.f32 0.0, %v1552
  %1554 = vmatmul.f32.gmra.mxu0 %v1500
  %v1555 = vpop.f32.mrf.mxu0
  %v1556 = vadd.f32 0.0, %v1555
  %1557 = vmatmul.f32.gmra.mxu0 %v1502
  %v1558 = vpop.f32.mrf.mxu0
  %v1559 = vadd.f32 0.0, %v1558
  %1560 = vmatmul.f32.gmra.mxu0 %v1504
  %v1561 = vpop.f32.mrf.mxu0
  %v1562 = vadd.f32 0.0, %v1561
  %1563 = vmatmul.f32.gmra.mxu0 %v1506
  %v1564 = vpop.f32.mrf.mxu0
  %v1565 = vadd.f32 0.0, %v1564
  %1566 = vmatmul.f32.gmra.mxu0 %v1508
  %v1567 = vpop.f32.mrf.mxu0
  %v1568 = vadd.f32 0.0, %v1567
  %1569 = vmatmul.f32.gmra.mxu0 %v1510
  %v1570 = vpop.f32.mrf.mxu0
  %v1571 = vadd.f32 0.0, %v1570
  %1572 = vmatmul.f32.gmra.mxu0 %v1512
  %v1573 = vpop.f32.mrf.mxu0
  %v1574 = vadd.f32 0.0, %v1573
  %1575 = vmatmul.f32.gmra.mxu0 %v1514
  %v1576 = vpop.f32.mrf.mxu0
  %v1577 = vadd.f32 0.0, %v1576
  %1578 = vmatmul.f32.gmra.mxu0 %v1516
  %v1579 = vpop.f32.mrf.mxu0
  %v1580 = vadd.f32 0.0, %v1579
  %1581 = vmatmul.f32.gmra.mxu0 %v1518
  %v1582 = vpop.f32.mrf.mxu0
  %v1583 = vadd.f32 0.0, %v1582
  %1584 = vdwg.mxu0
  %1585 = vmatpush.msra.mxu0 %v100
  %1586 = vmatpush.msra.mxu0 %v99
  %1587 = vmatpush.msra.mxu0 %v98
  %1588 = vmatpush.msra.mxu0 %v97
  %1589 = vmatpush.msra.mxu0 %v96
  %1590 = vmatpush.msra.mxu0 %v95
  %1591 = vmatpush.msra.mxu0 %v94
  %1592 = vmatpush.msra.mxu0 %v93
  %1593 = vmatpush.msra.mxu0 %v92
  %1594 = vmatpush.msra.mxu0 %v91
  %1595 = vmatpush.msra.mxu0 %v90
  %1596 = vmatpush.msra.mxu0 %v89
  %1597 = vmatpush.msra.mxu0 %v88
  %1598 = vmatpush.msra.mxu0 %v87
  %1599 = vmatpush.msra.mxu0 %v86
  %1600 = vmatpush.msra.mxu0 %v85
  %1601 = vmatmul.f32.gmra.mxu0 %v1489
  %v1602 = vpop.f32.mrf.mxu0
  %v1603 = vadd.f32 %v1538, %v1602
  %1604 = vmatmul.f32.gmra.mxu0 %v1491
  %v1605 = vpop.f32.mrf.mxu0
  %v1606 = vadd.f32 %v1541, %v1605
  %1607 = vmatmul.f32.gmra.mxu0 %v1493
  %v1608 = vpop.f32.mrf.mxu0
  %v1609 = vadd.f32 %v1544, %v1608
  %1610 = vmatmul.f32.gmra.mxu0 %v1495
  %v1611 = vpop.f32.mrf.mxu0
  %v1612 = vadd.f32 %v1547, %v1611
  %1613 = vmatmul.f32.gmra.mxu0 %v1497
  %v1614 = vpop.f32.mrf.mxu0
  %v1615 = vadd.f32 %v1550, %v1614
  %1616 = vmatmul.f32.gmra.mxu0 %v1499
  %v1617 = vpop.f32.mrf.mxu0
  %v1618 = vadd.f32 %v1553, %v1617
  %1619 = vmatmul.f32.gmra.mxu0 %v1501
  %v1620 = vpop.f32.mrf.mxu0
  %v1621 = vadd.f32 %v1556, %v1620
  %1622 = vmatmul.f32.gmra.mxu0 %v1503
  %v1623 = vpop.f32.mrf.mxu0
  %v1624 = vadd.f32 %v1559, %v1623
  %1625 = vmatmul.f32.gmra.mxu0 %v1505
  %v1626 = vpop.f32.mrf.mxu0
  %v1627 = vadd.f32 %v1562, %v1626
  %1628 = vmatmul.f32.gmra.mxu0 %v1507
  %v1629 = vpop.f32.mrf.mxu0
  %v1630 = vadd.f32 %v1565, %v1629
  %1631 = vmatmul.f32.gmra.mxu0 %v1509
  %v1632 = vpop.f32.mrf.mxu0
  %v1633 = vadd.f32 %v1568, %v1632
  %1634 = vmatmul.f32.gmra.mxu0 %v1511
  %v1635 = vpop.f32.mrf.mxu0
  %v1636 = vadd.f32 %v1571, %v1635
  %1637 = vmatmul.f32.gmra.mxu0 %v1513
  %v1638 = vpop.f32.mrf.mxu0
  %v1639 = vadd.f32 %v1574, %v1638
  %1640 = vmatmul.f32.gmra.mxu0 %v1515
  %v1641 = vpop.f32.mrf.mxu0
  %v1642 = vadd.f32 %v1577, %v1641
  %1643 = vmatmul.f32.gmra.mxu0 %v1517
  %v1644 = vpop.f32.mrf.mxu0
  %v1645 = vadd.f32 %v1580, %v1644
  %1646 = vmatmul.f32.gmra.mxu0 %v1519
  %v1647 = vpop.f32.mrf.mxu0
  %v1648 = vadd.f32 %v1583, %v1647
  %1649 = vdwg.mxu0
  %s1650 = smul.u32 0, 128
  %v1651 = vlaneseq
  %v1652 = vshrl.u32 %v1651, 7
  %v1653 = vadd.s32 %v1652, 8
  %v1654 = vadd.s32 %v1652, 16
  %v1655 = vadd.s32 %v1652, 24
  %v1656 = vadd.s32 %v1652, 32
  %v1657 = vadd.s32 %v1652, 40
  %v1658 = vadd.s32 %v1652, 48
  %v1659 = vadd.s32 %v1652, 56
  %v1660 = vadd.s32 %v1652, 64
  %v1661 = vadd.s32 %v1652, 72
  %v1662 = vadd.s32 %v1652, 80
  %v1663 = vadd.s32 %v1652, 88
  %v1664 = vadd.s32 %v1652, 96
  %v1665 = vadd.s32 %v1652, 104
  %v1666 = vadd.s32 %v1652, 112
  %v1667 = vadd.s32 %v1652, 120
  %v1668 = vstv %s1650
  %v1669 = vadd.s32 %v1668, %v1652
  %v1670 = vadd.s32 %v1668, %v1653
  %v1671 = vadd.s32 %v1668, %v1654
  %v1672 = vadd.s32 %v1668, %v1655
  %v1673 = vadd.s32 %v1668, %v1656
  %v1674 = vadd.s32 %v1668, %v1657
  %v1675 = vadd.s32 %v1668, %v1658
  %v1676 = vadd.s32 %v1668, %v1659
  %v1677 = vadd.s32 %v1668, %v1660
  %v1678 = vadd.s32 %v1668, %v1661
  %v1679 = vadd.s32 %v1668, %v1662
  %v1680 = vadd.s32 %v1668, %v1663
  %v1681 = vadd.s32 %v1668, %v1664
  %v1682 = vadd.s32 %v1668, %v1665
  %v1683 = vadd.s32 %v1668, %v1666
  %v1684 = vadd.s32 %v1668, %v1667
  %vm1685 = vcmp.lt.s32.totalorder %v1669, 16
  %vm1686 = vcmp.lt.s32.totalorder %v1670, 16
  %vm1687 = vcmp.lt.s32.totalorder %v1671, 16
  %vm1688 = vcmp.lt.s32.totalorder %v1672, 16
  %vm1689 = vcmp.lt.s32.totalorder %v1673, 16
  %vm1690 = vcmp.lt.s32.totalorder %v1674, 16
  %vm1691 = vcmp.lt.s32.totalorder %v1675, 16
  %vm1692 = vcmp.lt.s32.totalorder %v1676, 16
  %vm1693 = vcmp.lt.s32.totalorder %v1677, 16
  %vm1694 = vcmp.lt.s32.totalorder %v1678, 16
  %vm1695 = vcmp.lt.s32.totalorder %v1679, 16
  %vm1696 = vcmp.lt.s32.totalorder %v1680, 16
  %vm1697 = vcmp.lt.s32.totalorder %v1681, 16
  %vm1698 = vcmp.lt.s32.totalorder %v1682, 16
  %vm1699 = vcmp.lt.s32.totalorder %v1683, 16
  %vm1700 = vcmp.lt.s32.totalorder %v1684, 16
  %v1701 = vsub.f32 %v1603, %v388
  %v1702 = vsub.f32 %v1606, %v403
  %v1703 = vsub.f32 %v1609, %v418
  %v1704 = vsub.f32 %v1612, %v433
  %v1705 = vsub.f32 %v1615, %v448
  %v1706 = vsub.f32 %v1618, %v463
  %v1707 = vsub.f32 %v1621, %v478
  %v1708 = vsub.f32 %v1624, %v493
  %v1709 = vsub.f32 %v1627, %v508
  %v1710 = vsub.f32 %v1630, %v523
  %v1711 = vsub.f32 %v1633, %v538
  %v1712 = vsub.f32 %v1636, %v553
  %v1713 = vsub.f32 %v1639, %v568
  %v1714 = vsub.f32 %v1642, %v583
  %v1715 = vsub.f32 %v1645, %v598
  %v1716 = vsub.f32 %v1648, %v613
  %v1717 = vmul.f32 %v1701, %v1701
  %v1718 = vmul.f32 %v1702, %v1702
  %v1719 = vmul.f32 %v1703, %v1703
  %v1720 = vmul.f32 %v1704, %v1704
  %v1721 = vmul.f32 %v1705, %v1705
  %v1722 = vmul.f32 %v1706, %v1706
  %v1723 = vmul.f32 %v1707, %v1707
  %v1724 = vmul.f32 %v1708, %v1708
  %v1725 = vmul.f32 %v1709, %v1709
  %v1726 = vmul.f32 %v1710, %v1710
  %v1727 = vmul.f32 %v1711, %v1711
  %v1728 = vmul.f32 %v1712, %v1712
  %v1729 = vmul.f32 %v1713, %v1713
  %v1730 = vmul.f32 %v1714, %v1714
  %v1731 = vmul.f32 %v1715, %v1715
  %v1732 = vmul.f32 %v1716, %v1716
  %v1733 = vsel %vm1685, 1, 0
  %v1734 = vsel %vm1686, 1, 0
  %v1735 = vsel %vm1687, 1, 0
  %v1736 = vsel %vm1688, 1, 0
  %v1737 = vsel %vm1689, 1, 0
  %v1738 = vsel %vm1690, 1, 0
  %v1739 = vsel %vm1691, 1, 0
  %v1740 = vsel %vm1692, 1, 0
  %v1741 = vsel %vm1693, 1, 0
  %v1742 = vsel %vm1694, 1, 0
  %v1743 = vsel %vm1695, 1, 0
  %v1744 = vsel %vm1696, 1, 0
  %v1745 = vsel %vm1697, 1, 0
  %v1746 = vsel %vm1698, 1, 0
  %v1747 = vsel %vm1699, 1, 0
  %v1748 = vsel %vm1700, 1, 0
  %vm1749 = vcmp.eq.s32.totalorder %v1733, 1
  %vm1750 = vcmp.eq.s32.totalorder %v1734, 1
  %vm1751 = vcmp.eq.s32.totalorder %v1735, 1
  %vm1752 = vcmp.eq.s32.totalorder %v1736, 1
  %vm1753 = vcmp.eq.s32.totalorder %v1737, 1
  %vm1754 = vcmp.eq.s32.totalorder %v1738, 1
  %vm1755 = vcmp.eq.s32.totalorder %v1739, 1
  %vm1756 = vcmp.eq.s32.totalorder %v1740, 1
  %vm1757 = vcmp.eq.s32.totalorder %v1741, 1
  %vm1758 = vcmp.eq.s32.totalorder %v1742, 1
  %vm1759 = vcmp.eq.s32.totalorder %v1743, 1
  %vm1760 = vcmp.eq.s32.totalorder %v1744, 1
  %vm1761 = vcmp.eq.s32.totalorder %v1745, 1
  %vm1762 = vcmp.eq.s32.totalorder %v1746, 1
  %vm1763 = vcmp.eq.s32.totalorder %v1747, 1
  %vm1764 = vcmp.eq.s32.totalorder %v1748, 1
  %v1765 = vsel %vm1749, %v1717, 0.0
  %v1766 = vsel %vm1750, %v1718, 0.0
  %v1767 = vsel %vm1751, %v1719, 0.0
  %v1768 = vsel %vm1752, %v1720, 0.0
  %v1769 = vsel %vm1753, %v1721, 0.0
  %v1770 = vsel %vm1754, %v1722, 0.0
  %v1771 = vsel %vm1755, %v1723, 0.0
  %v1772 = vsel %vm1756, %v1724, 0.0
  %v1773 = vsel %vm1757, %v1725, 0.0
  %v1774 = vsel %vm1758, %v1726, 0.0
  %v1775 = vsel %vm1759, %v1727, 0.0
  %v1776 = vsel %vm1760, %v1728, 0.0
  %v1777 = vsel %vm1761, %v1729, 0.0
  %v1778 = vsel %vm1762, %v1730, 0.0
  %v1779 = vsel %vm1763, %v1731, 0.0
  %v1780 = vsel %vm1764, %v1732, 0.0
  %v1781 = vsel %vm117, %v1765, 0.0
  %v1782 = vsel %vm117, %v1766, 0.0
  %v1783 = vadd.f32 %v1781, %v1782
  %v1784 = vsel %vm117, %v1767, 0.0
  %v1785 = vadd.f32 %v1783, %v1784
  %v1786 = vsel %vm117, %v1768, 0.0
  %v1787 = vadd.f32 %v1785, %v1786
  %v1788 = vsel %vm117, %v1769, 0.0
  %v1789 = vadd.f32 %v1787, %v1788
  %v1790 = vsel %vm117, %v1770, 0.0
  %v1791 = vadd.f32 %v1789, %v1790
  %v1792 = vsel %vm117, %v1771, 0.0
  %v1793 = vadd.f32 %v1791, %v1792
  %v1794 = vsel %vm117, %v1772, 0.0
  %v1795 = vadd.f32 %v1793, %v1794
  %v1796 = vsel %vm117, %v1773, 0.0
  %v1797 = vadd.f32 %v1795, %v1796
  %v1798 = vsel %vm117, %v1774, 0.0
  %v1799 = vadd.f32 %v1797, %v1798
  %v1800 = vsel %vm117, %v1775, 0.0
  %v1801 = vadd.f32 %v1799, %v1800
  %v1802 = vsel %vm117, %v1776, 0.0
  %v1803 = vadd.f32 %v1801, %v1802
  %v1804 = vsel %vm117, %v1777, 0.0
  %v1805 = vadd.f32 %v1803, %v1804
  %v1806 = vsel %vm117, %v1778, 0.0
  %v1807 = vadd.f32 %v1805, %v1806
  %v1808 = vsel %vm117, %v1779, 0.0
  %v1809 = vadd.f32 %v1807, %v1808
  %v1810 = vsel %vm117, %v1780, 0.0
  %v1811 = vadd.f32 %v1809, %v1810
  %1812 = vadd.xlane.f32.xlu0 %v1811
  %v1813 = vpop.xlane.xlu0 %1812
  %v1814 = vrot.slane %v1813, 4
  %v1815 = vadd.f32 %v1813, %v1814
  %v1816 = vrot.slane %v1815, 2
  %v1817 = vadd.f32 %v1815, %v1816
  %v1818 = vrot.slane %v1817, 1
  %v1819 = vadd.f32 %v1817, %v1818
  %s1820 = vtos %v1819
  %1821 = vst.msk [vmem:[%s4] sm:$0xff] %vm117, %v1603
  %1822 = vst.msk [vmem:[%s4 + $0x8] sm:$0xff] %vm117, %v1606
  %1823 = vst.msk [vmem:[%s4 + $0x10] sm:$0xff] %vm117, %v1609
  %1824 = vst.msk [vmem:[%s4 + $0x18] sm:$0xff] %vm117, %v1612
  %1825 = vst.msk [vmem:[%s4 + $0x20] sm:$0xff] %vm117, %v1615
  %1826 = vst.msk [vmem:[%s4 + $0x28] sm:$0xff] %vm117, %v1618
  %1827 = vst.msk [vmem:[%s4 + $0x30] sm:$0xff] %vm117, %v1621
  %1828 = vst.msk [vmem:[%s4 + $0x38] sm:$0xff] %vm117, %v1624
  %1829 = vst.msk [vmem:[%s4 + $0x40] sm:$0xff] %vm117, %v1627
  %1830 = vst.msk [vmem:[%s4 + $0x48] sm:$0xff] %vm117, %v1630
  %1831 = vst.msk [vmem:[%s4 + $0x50] sm:$0xff] %vm117, %v1633
  %1832 = vst.msk [vmem:[%s4 + $0x58] sm:$0xff] %vm117, %v1636
  %1833 = vst.msk [vmem:[%s4 + $0x60] sm:$0xff] %vm117, %v1639
  %1834 = vst.msk [vmem:[%s4 + $0x68] sm:$0xff] %vm117, %v1642
  %1835 = vst.msk [vmem:[%s4 + $0x70] sm:$0xff] %vm117, %v1645
  %1836 = vst.msk [vmem:[%s4 + $0x78] sm:$0xff] %vm117, %v1648
  %v1837 = vperm.slane %v1183, %v1102
  %v1838 = vadd.s32 %v1102, 4294967288
  %v1839 = vperm.slane %v1199, %v1838
  %vm1840 = vcmask 130112
  %v1841 = vsel %vm1840, %v1839, %v1837
  %v1842 = vadd.s32 %v1102, 4294967280
  %v1843 = vperm.slane %v1215, %v1842
  %vm1844 = vcmask 195712
  %v1845 = vsel %vm1844, %v1843, %v1841
  %v1846 = vadd.s32 %v1102, 4294967272
  %v1847 = vperm.slane %v1231, %v1846
  %vm1848 = vcmask 261312
  %v1849 = vsel %vm1848, %v1847, %v1845
  %v1850 = vadd.s32 %v1102, 4294967264
  %v1851 = vperm.slane %v1247, %v1850
  %vm1852 = vcmask 326912
  %v1853 = vsel %vm1852, %v1851, %v1849
  %v1854 = vadd.s32 %v1102, 4294967256
  %v1855 = vperm.slane %v1263, %v1854
  %vm1856 = vcmask 392512
  %v1857 = vsel %vm1856, %v1855, %v1853
  %v1858 = vadd.s32 %v1102, 4294967248
  %v1859 = vperm.slane %v1279, %v1858
  %vm1860 = vcmask 458112
  %v1861 = vsel %vm1860, %v1859, %v1857
  %v1862 = vadd.s32 %v1102, 4294967240
  %v1863 = vperm.slane %v1295, %v1862
  %vm1864 = vcmask 523712
  %v1865 = vsel %vm1864, %v1863, %v1861
  %v1866 = vadd.s32 %v1102, 4294967232
  %v1867 = vperm.slane %v1311, %v1866
  %vm1868 = vcmask 589312
  %v1869 = vsel %vm1868, %v1867, %v1865
  %v1870 = vadd.s32 %v1102, 4294967224
  %v1871 = vperm.slane %v1327, %v1870
  %vm1872 = vcmask 654912
  %v1873 = vsel %vm1872, %v1871, %v1869
  %v1874 = vadd.s32 %v1102, 4294967216
  %v1875 = vperm.slane %v1343, %v1874
  %vm1876 = vcmask 720512
  %v1877 = vsel %vm1876, %v1875, %v1873
  %v1878 = vadd.s32 %v1102, 4294967208
  %v1879 = vperm.slane %v1359, %v1878
  %vm1880 = vcmask 786112
  %v1881 = vsel %vm1880, %v1879, %v1877
  %v1882 = vadd.s32 %v1102, 4294967200
  %v1883 = vperm.slane %v1375, %v1882
  %vm1884 = vcmask 851712
  %v1885 = vsel %vm1884, %v1883, %v1881
  %v1886 = vadd.s32 %v1102, 4294967192
  %v1887 = vperm.slane %v1391, %v1886
  %vm1888 = vcmask 917312
  %v1889 = vsel %vm1888, %v1887, %v1885
  %v1890 = vadd.s32 %v1102, 4294967184
  %v1891 = vperm.slane %v1407, %v1890
  %vm1892 = vcmask 982912
  %v1893 = vsel %vm1892, %v1891, %v1889
  %v1894 = vadd.s32 %v1102, 4294967176
  %v1895 = vperm.slane %v1423, %v1894
  %vm1896 = vcmask 1048512
  %v1897 = vsel %vm1896, %v1895, %v1893
  %1898 = vst [vmem:[%s5] sm:$0x1] %v1897
  %v1899 = vstv %s1820
  %1900 = vst [vmem:[%s6] sm:$0x1] %v1899
  // Predicated region
  $region18: #{quantizer_forward.1} parent=0 // pred_check
    _
  $region19: #{quantizer_forward.1} parent=0 // pred_check_branch
    %1902 = sbr.rel (0) target = $region21
  $region20: #{quantizer_forward.1} parent=0 // pred_region
    _
  $region21: #{quantizer_forward.1} parent=0 // pred_fallthru
    _
  // Predicated region
  $region22: #{quantizer_forward.1} parent=0 // pred_check
    _
  $region23: #{quantizer_forward.1} parent=0 // pred_check_branch
    %1904 = sbr.rel (0) target = $region25
  $region24: #{quantizer_forward.1} parent=0 // pred_region
    _
  $region25: #{quantizer_forward.1} parent=0 // pred_fallthru
    _
  // Predicated region
  $region26: #{quantizer_forward.1} parent=0 // pred_check
    _
  $region27: #{quantizer_forward.1} parent=0 // pred_check_branch
    %1906 = sbr.rel (0) target = $region29
  $region28: #{quantizer_forward.1} parent=0 // pred_region
    _
  $region29: #{quantizer_forward.1} parent=0 // pred_fallthru
    _
  // Predicated region
  $region30: #{quantizer_forward.1} parent=0 // pred_check
    _
  $region31: #{quantizer_forward.1} parent=0 // pred_check_branch
    %1908 = sbr.rel (0) target = $region33
  $region32: #{quantizer_forward.1} parent=0 // pred_region
    _
  $region33: #{quantizer_forward.1} parent=0 // pred_fallthru
    _
  // Predicated region
  $region34: #{quantizer_forward.1} parent=0 // pred_check
    _
  $region35: #{quantizer_forward.1} parent=0 // pred_check_branch
    %1910 = sbr.rel (0) target = $region37
  $region36: #{quantizer_forward.1} parent=0 // pred_region
    _
  $region37: #{quantizer_forward.1} parent=0 // pred_fallthru
    _
  // Predicated region
  $region38: #{quantizer_forward.1} parent=0 // pred_check
    _
  $region39: #{quantizer_forward.1} parent=0 // pred_check_branch
    %1912 = sbr.rel (0) target = $region41
  $region40: #{quantizer_forward.1} parent=0 // pred_region
    _
  $region41: #{quantizer_forward.1} parent=0 // pred_fallthru
    _

</llo_original>
